<compile_context>
chip_gen: v5e
topology: v5e:2x2
jax: 0.10.0
libtpu: 0.0.40
codegen_flags: <defaults>
</compile_context>

<pallas_src>
import math

import jax
import jax.numpy as jnp
from jax.experimental import pallas as pl
from jax.experimental.pallas import tpu as pltpu

# ----------------------------- config (scaled-down bert-base) -----------------------------
BATCH = 2
SEQ = 8
HIDDEN = 128            # bert-base: 768
NHEAD = 4               # bert-base: 12
DH = HIDDEN // NHEAD    # per-head dim (32)
INTERMEDIATE = 256      # bert-base: 3072
NLAYERS = 2             # bert-base: 12
VOCAB = 1000            # bert-base: 30522
MAXPOS = 64
OUT_FEATS = 96          # from the module: nn.Linear(768, out_feats=96)
OUT_PAD = 128           # lane-dense padded output width (sliced back to 96 outside)
LN_EPS = 1e-12
SCALE = 1.0 / math.sqrt(DH)


# ----------------------------- in-kernel helpers -----------------------------
def _ln(x, g, b):
    # One-pass LayerNorm: var = E[x^2] - mu^2 (one reduction pair, no (x-mu)^2 temp).
    mu = jnp.mean(x, axis=-1, keepdims=True)
    ms = jnp.mean(x * x, axis=-1, keepdims=True)
    var = jnp.maximum(ms - mu * mu, 0.0)
    return (x - mu) * jax.lax.rsqrt(var + LN_EPS) * g + b


def _gelu(x):
    # TODO(synk): exact erf-GELU as in HF BERT ("gelu"); tanh approximation used here.
    c = math.sqrt(2.0 / math.pi)
    return 0.5 * x * (1.0 + jnp.tanh(c * (x + 0.044715 * x * x * x)))


# ----------------------------- fused Pallas kernel -----------------------------
def fused_bert_kernel(tc_ref,                            # scalar-prefetch: token_count (B,) in SMEM
                      emb_ref, eg_ref, eb_ref,
                      wqkv_ref, bqkv_ref, wo_ref, bo_ref,
                      ln1g_ref, ln1b_ref, w1_ref, b1_ref,
                      w2_ref, b2_ref, ln2g_ref, ln2b_ref,
                      ow_ref, ob_ref,
                      o_ref, x_sc):
    """Grid = (batch "parallel", layer "arbitrary").  Activation lives in x_sc (VMEM)."""
    b = pl.program_id(0)
    l = pl.program_id(1)

    # ---- layer 0: embedding LayerNorm seeds the resident activation ----
    @pl.when(l == 0)
    def _():
        x_sc[...] = _ln(emb_ref[0].astype(jnp.float32), eg_ref[...], eb_ref[...])

    x = x_sc[...]                                        # (S, H) f32

    # ---- key-padding bias generated in-kernel (HF: (1 - mask) * -10000), no dense HBM mask ----
    count = tc_ref[b]
    kpos = jax.lax.broadcasted_iota(jnp.int32, (1, SEQ), 1)
    bias = jnp.where(kpos < count, 0.0, -10000.0).astype(jnp.float32)   # (1, S) key bias

    # ---- Q/K/V: ONE lane-dense 2D matmul (bf16 inputs, f32 accumulation) ----
    qkv = jnp.dot(x.astype(jnp.bfloat16), wqkv_ref[0],
                  preferred_element_type=jnp.float32) + bqkv_ref[0]      # (S, 3H)

    def split_heads(m):                                  # (S, H) -> (NHEAD, S, DH), static lane slices
        return jnp.stack([m[:, h * DH:(h + 1) * DH] for h in range(NHEAD)], axis=0)

    q = split_heads(qkv[:, 0 * HIDDEN:1 * HIDDEN])
    k = split_heads(qkv[:, 1 * HIDDEN:2 * HIDDEN])
    v = split_heads(qkv[:, 2 * HIDDEN:3 * HIDDEN])

    # ---- all-head scores + masked softmax ----
    s = jax.lax.dot_general(q, k, (((2,), (2,)), ((0,), (0,))),
                            preferred_element_type=jnp.float32) * SCALE  # (NHEAD, S, S)
    s = s + bias                                                         # broadcast over heads/rows
    m = jnp.max(s, axis=-1, keepdims=True)
    e = jnp.exp(s - m)
    p = e * pl.reciprocal(jnp.sum(e, axis=-1, keepdims=True), approx=True)

    # ---- context, then ONE lane-dense output projection over the concatenated heads ----
    ctx = jax.lax.dot_general(p.astype(jnp.bfloat16), v.astype(jnp.bfloat16),
                              (((2,), (1,)), ((0,), (0,))),
                              preferred_element_type=jnp.float32)        # (NHEAD, S, DH)
    ctx = jnp.concatenate([ctx[h] for h in range(NHEAD)], axis=1)        # (S, H) heads on lanes
    attn = jnp.dot(ctx.astype(jnp.bfloat16), wo_ref[0],
                   preferred_element_type=jnp.float32) + bo_ref[0]       # (S, H)

    h1 = _ln(x + attn, ln1g_ref[0], ln1b_ref[0])

    # ---- feed-forward block ----
    ff = jnp.dot(h1.astype(jnp.bfloat16), w1_ref[0],
                 preferred_element_type=jnp.float32) + b1_ref[0]         # (S, I)
    ff = _gelu(ff)
    ff = jnp.dot(ff.astype(jnp.bfloat16), w2_ref[0],
                 preferred_element_type=jnp.float32) + b2_ref[0]         # (S, H)
    h2 = _ln(h1 + ff, ln2g_ref[0], ln2b_ref[0])

    x_sc[...] = h2                                                       # carry to next layer

    # ---- last layer: fused output Linear, lane-dense (96 padded to 128) store ----
    @pl.when(l == pl.num_programs(1) - 1)
    def _():
        y = jnp.dot(h2, ow_ref[...], preferred_element_type=jnp.float32) + ob_ref[...]
        o_ref[0] = y.astype(o_ref.dtype)


# ----------------------------- parameter init (deterministic) -----------------------------
def init_params(key):
    ks = iter(jax.random.split(key, 128))
    n = lambda shape, s=0.02: (s * jax.random.normal(next(ks), shape)).astype(jnp.float32)

    wqkv, bqkv, wo, bo = [], [], [], []
    ln1g, ln1b, w1, b1, w2, b2, ln2g, ln2b = [], [], [], [], [], [], [], []
    for _ in range(NLAYERS):
        wq, wk, wv = n((HIDDEN, HIDDEN)), n((HIDDEN, HIDDEN)), n((HIDDEN, HIDDEN))
        # lane-dense packing: columns [Wq | Wk | Wv]; within each, head h = cols h*DH:(h+1)*DH
        wqkv.append(jnp.concatenate([wq, wk, wv], axis=1).astype(jnp.bfloat16))   # (H, 3H) bf16
        bqkv.append(jnp.zeros((1, 3 * HIDDEN), jnp.float32))
        wo.append(n((HIDDEN, HIDDEN)).astype(jnp.bfloat16))                        # flat (H, H) bf16
        bo.append(jnp.zeros((1, HIDDEN), jnp.float32))
        ln1g.append(jnp.ones((1, HIDDEN), jnp.float32))
        ln1b.append(jnp.zeros((1, HIDDEN), jnp.float32))
        w1.append(n((HIDDEN, INTERMEDIATE)).astype(jnp.bfloat16))
        b1.append(jnp.zeros((1, INTERMEDIATE), jnp.float32))
        w2.append(n((INTERMEDIATE, HIDDEN)).astype(jnp.bfloat16))
        b2.append(jnp.zeros((1, HIDDEN), jnp.float32))
        ln2g.append(jnp.ones((1, HIDDEN), jnp.float32))
        ln2b.append(jnp.zeros((1, HIDDEN), jnp.float32))

    stack = lambda xs: jnp.stack(xs, axis=0)
    return {
        "word_emb": n((VOCAB, HIDDEN)),
        "pos_emb": n((MAXPOS, HIDDEN)),
        "type_emb": n((2, HIDDEN)),
        "emb_ln_g": jnp.ones((1, HIDDEN), jnp.float32),
        "emb_ln_b": jnp.zeros((1, HIDDEN), jnp.float32),
        # output Linear, zero-padded to a lane-dense 128 columns:
        "out_w": jnp.pad(n((HIDDEN, OUT_FEATS)), ((0, 0), (0, OUT_PAD - OUT_FEATS))),
        "out_b": jnp.zeros((1, OUT_PAD), jnp.float32),
        # per-layer weights stacked on a leading NLAYERS axis (streamed via index_map):
        "wqkv": stack(wqkv), "bqkv": stack(bqkv), "wo": stack(wo), "bo": stack(bo),
        "ln1g": stack(ln1g), "ln1b": stack(ln1b),
        "w1": stack(w1), "b1": stack(b1), "w2": stack(w2), "b2": stack(b2),
        "ln2g": stack(ln2g), "ln2b": stack(ln2b),
    }


def _vmem_limit_bytes():
    # Resident VMEM: 2x (double-buffered) per-layer blocks + 2x constants + activation scratch.
    per_layer = (2 * (HIDDEN * 3 * HIDDEN + HIDDEN * HIDDEN
                      + HIDDEN * INTERMEDIATE + INTERMEDIATE * HIDDEN)            # bf16 weights
                 + 4 * (3 * HIDDEN + 4 * HIDDEN + INTERMEDIATE + 2 * HIDDEN))     # f32 biases/LN
    const = 4 * (SEQ * HIDDEN + 2 * HIDDEN + HIDDEN * OUT_PAD + OUT_PAD + SEQ * OUT_PAD)
    scratch = 4 * SEQ * HIDDEN
    return int(max(4 * (2 * per_layer + 2 * const + scratch), 4 << 20))           # 4x headroom


# ----------------------------- forward (mirrors BertEncoder.forward, sample_flag=False) ---
def bert_encoder_forward(params, token_ids, token_count):
    B, S = token_ids.shape

    # Embeddings (gather is plain-JAX glue; everything else runs inside the fused kernel).
    emb = (jnp.take(params["word_emb"], token_ids, axis=0)
           + params["pos_emb"][:S][None, :, :]
           + params["type_emb"][0][None, None, :])                       # (B, S, H)

    def full(a):                      # whole-array block, constant index (fetched once)
        nd = a.ndim
        return pl.BlockSpec(a.shape, lambda b, l, tc, _nd=nd: (0,) * _nd)

    def per_layer(a):                 # select layer l's slice of a stacked weight
        nd = a.ndim
        return pl.BlockSpec((1,) + a.shape[1:],
                            lambda b, l, tc, _nd=nd: (l,) + (0,) * (_nd - 1))

    layer_args = (params["wqkv"], params["bqkv"], params["wo"], params["bo"],
                  params["ln1g"], params["ln1b"], params["w1"], params["b1"],
                  params["w2"], params["b2"], params["ln2g"], params["ln2b"])

    # TODO(synk): at bert-base scale add pipeline_mode=pl.Buffered(1) (or a K-tiling grid
    # axis) on the w1/w2 BlockSpecs so the bf16 weight stream fits v7x's 64 MiB VMEM.
    out_padded = pl.pallas_call(
        fused_bert_kernel,
        out_shape=jax.ShapeDtypeStruct((B, S, OUT_PAD), jnp.float32),
        grid_spec=pltpu.PrefetchScalarGridSpec(
            num_scalar_prefetch=1,                        # token_count -> SMEM, mask built in-kernel
            grid=(B, NLAYERS),
            in_specs=[pl.BlockSpec((1, S, HIDDEN), lambda b, l, tc: (b, 0, 0)),
                      full(params["emb_ln_g"]), full(params["emb_ln_b"])]
                     + [per_layer(a) for a in layer_args]
                     + [full(params["out_w"]), full(params["out_b"])],
            out_specs=pl.BlockSpec((1, S, OUT_PAD), lambda b, l, tc: (b, 0, 0)),
            scratch_shapes=[pltpu.VMEM((S, HIDDEN), jnp.float32)]),
        compiler_params=pltpu.CompilerParams(
            # batch across TensorCores (v7x megacore); layers sequential (residual in scratch)
            dimension_semantics=("parallel", "arbitrary"),
            vmem_limit_bytes=_vmem_limit_bytes()),
    )(token_count, emb, params["emb_ln_g"], params["emb_ln_b"],
      *layer_args, params["out_w"], params["out_b"])

    # memory = self.linear(memory) (already applied in-kernel); slice off lane padding,
    # then transpose(-1, -2) exactly like the module.
    memory = out_padded[:, :, :OUT_FEATS]                                 # (B, S, OUT)
    return jnp.transpose(memory, (0, 2, 1))                               # (B, OUT, S)


# ----------------------------- main -----------------------------
if __name__ == "__main__":
    key = jax.random.PRNGKey(0)
    k_param, k_ids = jax.random.split(key)

    params = init_params(k_param)
    token_ids = jax.random.randint(k_ids, (BATCH, SEQ), 0, VOCAB, dtype=jnp.int32)
    token_count = jnp.array([SEQ, 5], dtype=jnp.int32)   # max == SEQ, like the torch mask path

    fwd = jax.jit(bert_encoder_forward)
    out = fwd(params, token_ids, token_count)
    out = jax.block_until_ready(out)

    assert out.shape == (BATCH, OUT_FEATS, SEQ), out.shape
    assert bool(jnp.all(jnp.isfinite(out)))
    print("KERNEL_OK")
</pallas_src>

<mosaic_0001>
module attributes {stable_mosaic.version = 11 : i64} {
  func.func @fused_bert_kernel(%arg0: i32, %arg1: i32, %arg2: memref<2xi32, #tpu.memory_space<smem>>, %arg3: memref<1x8x128xf32, #tpu.memory_space<vmem>>, %arg4: memref<1x128xf32, #tpu.memory_space<vmem>>, %arg5: memref<1x128xf32, #tpu.memory_space<vmem>>, %arg6: memref<1x128x384xbf16, #tpu.memory_space<vmem>>, %arg7: memref<1x1x384xf32, #tpu.memory_space<vmem>>, %arg8: memref<1x128x128xbf16, #tpu.memory_space<vmem>>, %arg9: memref<1x1x128xf32, #tpu.memory_space<vmem>>, %arg10: memref<1x1x128xf32, #tpu.memory_space<vmem>>, %arg11: memref<1x1x128xf32, #tpu.memory_space<vmem>>, %arg12: memref<1x128x256xbf16, #tpu.memory_space<vmem>>, %arg13: memref<1x1x256xf32, #tpu.memory_space<vmem>>, %arg14: memref<1x256x128xbf16, #tpu.memory_space<vmem>>, %arg15: memref<1x1x128xf32, #tpu.memory_space<vmem>>, %arg16: memref<1x1x128xf32, #tpu.memory_space<vmem>>, %arg17: memref<1x1x128xf32, #tpu.memory_space<vmem>>, %arg18: memref<128x128xf32, #tpu.memory_space<vmem>>, %arg19: memref<1x128xf32, #tpu.memory_space<vmem>>, %arg20: memref<1x8x128xf32, #tpu.memory_space<vmem>>, %arg21: memref<8x128xf32, #tpu.memory_space<vmem>>) attributes {dimension_semantics = [#tpu.dimension_semantics<parallel>, #tpu.dimension_semantics<arbitrary>], iteration_bounds = array<i64: 2, 2>, scalar_prefetch = 1 : i64, scratch_operands = 1 : i64, tpu.core_type = #tpu.core_type<tc>, window_params = [{transform_indices = @transform_0, window_bounds = array<i64: 1, 8, 128>}, {pipeline_mode = #tpu.pipeline_mode<synchronous>, transform_indices = @transform_1, window_bounds = array<i64: 1, 128>}, {pipeline_mode = #tpu.pipeline_mode<synchronous>, transform_indices = @transform_2, window_bounds = array<i64: 1, 128>}, {transform_indices = @transform_3, window_bounds = array<i64: 1, 128, 384>}, {transform_indices = @transform_4, window_bounds = array<i64: 1, 1, 384>}, {transform_indices = @transform_5, window_bounds = array<i64: 1, 128, 128>}, {transform_indices = @transform_6, window_bounds = array<i64: 1, 1, 128>}, {transform_indices = @transform_7, window_bounds = array<i64: 1, 1, 128>}, {transform_indices = @transform_8, window_bounds = array<i64: 1, 1, 128>}, {transform_indices = @transform_9, window_bounds = array<i64: 1, 128, 256>}, {transform_indices = @transform_10, window_bounds = array<i64: 1, 1, 256>}, {transform_indices = @transform_11, window_bounds = array<i64: 1, 256, 128>}, {transform_indices = @transform_12, window_bounds = array<i64: 1, 1, 128>}, {transform_indices = @transform_13, window_bounds = array<i64: 1, 1, 128>}, {transform_indices = @transform_14, window_bounds = array<i64: 1, 1, 128>}, {pipeline_mode = #tpu.pipeline_mode<synchronous>, transform_indices = @transform_15, window_bounds = array<i64: 128, 128>}, {pipeline_mode = #tpu.pipeline_mode<synchronous>, transform_indices = @transform_16, window_bounds = array<i64: 1, 128>}, {transform_indices = @transform_17, window_bounds = array<i64: 1, 8, 128>}]} {
    %c0_i32 = arith.constant 0 : i32
    %0 = arith.cmpi eq, %arg1, %c0_i32 : i32
    %1 = arith.extui %0 : i1 to i32
    %c0_i32_0 = arith.constant 0 : i32
    %2 = arith.cmpi ne, %1, %c0_i32_0 : i32
    scf.if %2 {
      %c0_67 = arith.constant 0 : index
      %c0_68 = arith.constant 0 : index
      %c0_69 = arith.constant 0 : index
      %177 = vector.load %arg3[%c0_67, %c0_68, %c0_69] : memref<1x8x128xf32, #tpu.memory_space<vmem>>, vector<1x8x128xf32>
      %178 = vector.shape_cast %177 : vector<1x8x128xf32> to vector<8x128xf32>
      %c0_70 = arith.constant 0 : index
      %c0_71 = arith.constant 0 : index
      %179 = vector.load %arg4[%c0_70, %c0_71] : memref<1x128xf32, #tpu.memory_space<vmem>>, vector<1x128xf32>
      %c0_72 = arith.constant 0 : index
      %c0_73 = arith.constant 0 : index
      %180 = vector.load %arg5[%c0_72, %c0_73] : memref<1x128xf32, #tpu.memory_space<vmem>>, vector<1x128xf32>
      %cst_74 = arith.constant dense<0.000000e+00> : vector<8xf32>
      %181 = vector.multi_reduction <add>, %178, %cst_74 [1] : vector<8x128xf32> to vector<8xf32>
      %182 = vector.shape_cast %181 : vector<8xf32> to vector<8x1xf32>
      %cst_75 = arith.constant 1.280000e+02 : f32
      %183 = vector.broadcast %cst_75 : f32 to vector<8x1xf32>
      %184 = arith.divf %182, %183 : vector<8x1xf32>
      %185 = arith.mulf %178, %178 : vector<8x128xf32>
      %cst_76 = arith.constant dense<0.000000e+00> : vector<8xf32>
      %186 = vector.multi_reduction <add>, %185, %cst_76 [1] : vector<8x128xf32> to vector<8xf32>
      %187 = vector.shape_cast %186 : vector<8xf32> to vector<8x1xf32>
      %cst_77 = arith.constant 1.280000e+02 : f32
      %188 = vector.broadcast %cst_77 : f32 to vector<8x1xf32>
      %189 = arith.divf %187, %188 : vector<8x1xf32>
      %190 = arith.mulf %184, %184 : vector<8x1xf32>
      %191 = arith.subf %189, %190 : vector<8x1xf32>
      %cst_78 = arith.constant 0.000000e+00 : f32
      %192 = vector.broadcast %cst_78 : f32 to vector<8x1xf32>
      %193 = arith.maximumf %191, %192 : vector<8x1xf32>
      %194 = vector.broadcast %184 : vector<8x1xf32> to vector<8x128xf32>
      %195 = arith.subf %178, %194 : vector<8x128xf32>
      %cst_79 = arith.constant 9.99999996E-13 : f32
      %196 = vector.broadcast %cst_79 : f32 to vector<8x1xf32>
      %197 = arith.addf %193, %196 : vector<8x1xf32>
      %198 = math.rsqrt %197 : vector<8x1xf32>
      %199 = vector.broadcast %198 : vector<8x1xf32> to vector<8x128xf32>
      %200 = arith.mulf %195, %199 : vector<8x128xf32>
      %201 = vector.broadcast %179 : vector<1x128xf32> to vector<8x128xf32>
      %202 = arith.mulf %200, %201 : vector<8x128xf32>
      %203 = vector.broadcast %180 : vector<1x128xf32> to vector<8x128xf32>
      %204 = arith.addf %202, %203 : vector<8x128xf32>
      %c0_80 = arith.constant 0 : index
      %c0_81 = arith.constant 0 : index
      %205 = vector.load %arg21[%c0_80, %c0_81] : memref<8x128xf32, #tpu.memory_space<vmem>>, vector<8x128xf32>
      tpu.vector_store %arg21[%c0_80, %c0_81], %204 {strides = array<i32>} : memref<8x128xf32, #tpu.memory_space<vmem>>, vector<8x128xf32>,
    } else {
    }
    %c0 = arith.constant 0 : index
    %c0_1 = arith.constant 0 : index
    %3 = vector.load %arg21[%c0, %c0_1] : memref<8x128xf32, #tpu.memory_space<vmem>>, vector<8x128xf32>
    %4 = arith.index_cast %arg0 : i32 to index
    %5 = memref.load %arg2[%4] : memref<2xi32, #tpu.memory_space<smem>>
    %6 = tpu.iota {dimensions = array<i32: 1>} : vector<1x8xi32>
    %7 = vector.broadcast %5 : i32 to vector<1x8xi32>
    %8 = arith.cmpi slt, %6, %7 : vector<1x8xi32>
    %cst = arith.constant 0.000000e+00 : f32
    %cst_2 = arith.constant -1.000000e+04 : f32
    %9 = vector.broadcast %cst : f32 to vector<1x8xf32>
    %10 = vector.broadcast %cst_2 : f32 to vector<1x8xf32>
    %11 = arith.select %8, %9, %10 : vector<1x8xi1>, vector<1x8xf32>
    %12 = arith.truncf %3 : vector<8x128xf32> to vector<8x128xbf16>
    %c0_3 = arith.constant 0 : index
    %c0_4 = arith.constant 0 : index
    %c0_5 = arith.constant 0 : index
    %13 = vector.load %arg6[%c0_3, %c0_4, %c0_5] : memref<1x128x384xbf16, #tpu.memory_space<vmem>>, vector<1x128x384xbf16>
    %14 = vector.shape_cast %13 : vector<1x128x384xbf16> to vector<128x384xbf16>
    %cst_6 = arith.constant dense<0.000000e+00> : vector<8x384xf32>
    %15 = tpu.matmul %12, %14, %cst_6 {dimension_numbers = #tpu.dot_dimension_numbers<[1], [0], [0], [1], [0, 0, 1, 1], [], []>} : vector<8x128xbf16>, vector<128x384xbf16>, vector<8x384xf32> -> vector<8x384xf32>
    %c0_7 = arith.constant 0 : index
    %c0_8 = arith.constant 0 : index
    %c0_9 = arith.constant 0 : index
    %16 = vector.load %arg7[%c0_7, %c0_8, %c0_9] : memref<1x1x384xf32, #tpu.memory_space<vmem>>, vector<1x1x384xf32>
    %17 = vector.shape_cast %16 : vector<1x1x384xf32> to vector<1x384xf32>
    %18 = vector.broadcast %17 : vector<1x384xf32> to vector<8x384xf32>
    %19 = arith.addf %15, %18 : vector<8x384xf32>
    %20 = vector.extract_strided_slice %19 {offsets = [0, 0], sizes = [8, 128], strides = [1, 1]} : vector<8x384xf32> to vector<8x128xf32>
    %21 = vector.extract_strided_slice %20 {offsets = [0, 0], sizes = [8, 32], strides = [1, 1]} : vector<8x128xf32> to vector<8x32xf32>
    %22 = vector.extract_strided_slice %20 {offsets = [0, 32], sizes = [8, 32], strides = [1, 1]} : vector<8x128xf32> to vector<8x32xf32>
    %23 = vector.extract_strided_slice %20 {offsets = [0, 64], sizes = [8, 32], strides = [1, 1]} : vector<8x128xf32> to vector<8x32xf32>
    %24 = vector.extract_strided_slice %20 {offsets = [0, 96], sizes = [8, 32], strides = [1, 1]} : vector<8x128xf32> to vector<8x32xf32>
    %25 = vector.shape_cast %21 : vector<8x32xf32> to vector<1x8x32xf32>
    %26 = vector.shape_cast %22 : vector<8x32xf32> to vector<1x8x32xf32>
    %27 = vector.shape_cast %23 : vector<8x32xf32> to vector<1x8x32xf32>
    %28 = vector.shape_cast %24 : vector<8x32xf32> to vector<1x8x32xf32>
    %29 = tpu.concatenate %25, %26, %27, %28 in 0 : vector<1x8x32xf32>, vector<1x8x32xf32>, vector<1x8x32xf32>, vector<1x8x32xf32> -> vector<4x8x32xf32>
    %30 = vector.extract_strided_slice %19 {offsets = [0, 128], sizes = [8, 128], strides = [1, 1]} : vector<8x384xf32> to vector<8x128xf32>
    %31 = vector.extract_strided_slice %30 {offsets = [0, 0], sizes = [8, 32], strides = [1, 1]} : vector<8x128xf32> to vector<8x32xf32>
    %32 = vector.extract_strided_slice %30 {offsets = [0, 32], sizes = [8, 32], strides = [1, 1]} : vector<8x128xf32> to vector<8x32xf32>
    %33 = vector.extract_strided_slice %30 {offsets = [0, 64], sizes = [8, 32], strides = [1, 1]} : vector<8x128xf32> to vector<8x32xf32>
    %34 = vector.extract_strided_slice %30 {offsets = [0, 96], sizes = [8, 32], strides = [1, 1]} : vector<8x128xf32> to vector<8x32xf32>
    %35 = vector.shape_cast %31 : vector<8x32xf32> to vector<1x8x32xf32>
    %36 = vector.shape_cast %32 : vector<8x32xf32> to vector<1x8x32xf32>
    %37 = vector.shape_cast %33 : vector<8x32xf32> to vector<1x8x32xf32>
    %38 = vector.shape_cast %34 : vector<8x32xf32> to vector<1x8x32xf32>
    %39 = tpu.concatenate %35, %36, %37, %38 in 0 : vector<1x8x32xf32>, vector<1x8x32xf32>, vector<1x8x32xf32>, vector<1x8x32xf32> -> vector<4x8x32xf32>
    %40 = vector.extract_strided_slice %19 {offsets = [0, 256], sizes = [8, 128], strides = [1, 1]} : vector<8x384xf32> to vector<8x128xf32>
    %41 = vector.extract_strided_slice %40 {offsets = [0, 0], sizes = [8, 32], strides = [1, 1]} : vector<8x128xf32> to vector<8x32xf32>
    %42 = vector.extract_strided_slice %40 {offsets = [0, 32], sizes = [8, 32], strides = [1, 1]} : vector<8x128xf32> to vector<8x32xf32>
    %43 = vector.extract_strided_slice %40 {offsets = [0, 64], sizes = [8, 32], strides = [1, 1]} : vector<8x128xf32> to vector<8x32xf32>
    %44 = vector.extract_strided_slice %40 {offsets = [0, 96], sizes = [8, 32], strides = [1, 1]} : vector<8x128xf32> to vector<8x32xf32>
    %45 = vector.shape_cast %41 : vector<8x32xf32> to vector<1x8x32xf32>
    %46 = vector.shape_cast %42 : vector<8x32xf32> to vector<1x8x32xf32>
    %47 = vector.shape_cast %43 : vector<8x32xf32> to vector<1x8x32xf32>
    %48 = vector.shape_cast %44 : vector<8x32xf32> to vector<1x8x32xf32>
    %49 = tpu.concatenate %45, %46, %47, %48 in 0 : vector<1x8x32xf32>, vector<1x8x32xf32>, vector<1x8x32xf32>, vector<1x8x32xf32> -> vector<4x8x32xf32>
    %cst_10 = arith.constant dense<0.000000e+00> : vector<4x8x8xf32>
    %50 = tpu.matmul %29, %39, %cst_10 {dimension_numbers = #tpu.dot_dimension_numbers<[2], [2], [1], [1], [0, 0, 0, 1, 1, 1], [0], [0]>} : vector<4x8x32xf32>, vector<4x8x32xf32>, vector<4x8x8xf32> -> vector<4x8x8xf32>
    %cst_11 = arith.constant 0.176776692 : f32
    %51 = vector.broadcast %cst_11 : f32 to vector<4x8x8xf32>
    %52 = arith.mulf %50, %51 : vector<4x8x8xf32>
    %53 = vector.shape_cast %11 : vector<1x8xf32> to vector<1x1x8xf32>
    %54 = vector.broadcast %53 : vector<1x1x8xf32> to vector<4x8x8xf32>
    %55 = arith.addf %52, %54 : vector<4x8x8xf32>
    %cst_12 = arith.constant dense<0xFF800000> : vector<4x8xf32>
    %56 = vector.multi_reduction <maximumf>, %55, %cst_12 [2] : vector<4x8x8xf32> to vector<4x8xf32>
    %57 = vector.shape_cast %56 : vector<4x8xf32> to vector<4x8x1xf32>
    %58 = vector.broadcast %57 : vector<4x8x1xf32> to vector<4x8x8xf32>
    %59 = arith.subf %55, %58 : vector<4x8x8xf32>
    %60 = math.exp %59 : vector<4x8x8xf32>
    %cst_13 = arith.constant dense<0.000000e+00> : vector<4x8xf32>
    %61 = vector.multi_reduction <add>, %60, %cst_13 [2] : vector<4x8x8xf32> to vector<4x8xf32>
    %62 = vector.shape_cast %61 : vector<4x8xf32> to vector<4x8x1xf32>
    %63 = tpu.reciprocal %62 {approx = true} : vector<4x8x1xf32> -> vector<4x8x1xf32>
    %64 = vector.broadcast %63 : vector<4x8x1xf32> to vector<4x8x8xf32>
    %65 = arith.mulf %60, %64 : vector<4x8x8xf32>
    %66 = arith.truncf %65 : vector<4x8x8xf32> to vector<4x8x8xbf16>
    %67 = arith.truncf %49 : vector<4x8x32xf32> to vector<4x8x32xbf16>
    %cst_14 = arith.constant dense<0.000000e+00> : vector<4x8x32xf32>
    %68 = tpu.matmul %66, %67, %cst_14 {dimension_numbers = #tpu.dot_dimension_numbers<[2], [1], [1], [2], [0, 0, 0, 1, 1, 2], [0], [0]>} : vector<4x8x8xbf16>, vector<4x8x32xbf16>, vector<4x8x32xf32> -> vector<4x8x32xf32>
    %69 = vector.extract_strided_slice %68 {offsets = [0, 0, 0], sizes = [1, 8, 32], strides = [1, 1, 1]} : vector<4x8x32xf32> to vector<1x8x32xf32>
    %70 = vector.shape_cast %69 : vector<1x8x32xf32> to vector<8x32xf32>
    %71 = vector.extract_strided_slice %68 {offsets = [1, 0, 0], sizes = [1, 8, 32], strides = [1, 1, 1]} : vector<4x8x32xf32> to vector<1x8x32xf32>
    %72 = vector.shape_cast %71 : vector<1x8x32xf32> to vector<8x32xf32>
    %73 = vector.extract_strided_slice %68 {offsets = [2, 0, 0], sizes = [1, 8, 32], strides = [1, 1, 1]} : vector<4x8x32xf32> to vector<1x8x32xf32>
    %74 = vector.shape_cast %73 : vector<1x8x32xf32> to vector<8x32xf32>
    %75 = vector.extract_strided_slice %68 {offsets = [3, 0, 0], sizes = [1, 8, 32], strides = [1, 1, 1]} : vector<4x8x32xf32> to vector<1x8x32xf32>
    %76 = vector.shape_cast %75 : vector<1x8x32xf32> to vector<8x32xf32>
    %77 = tpu.concatenate %70, %72, %74, %76 in 1 : vector<8x32xf32>, vector<8x32xf32>, vector<8x32xf32>, vector<8x32xf32> -> vector<8x128xf32>
    %78 = arith.truncf %77 : vector<8x128xf32> to vector<8x128xbf16>
    %c0_15 = arith.constant 0 : index
    %c0_16 = arith.constant 0 : index
    %c0_17 = arith.constant 0 : index
    %79 = vector.load %arg8[%c0_15, %c0_16, %c0_17] : memref<1x128x128xbf16, #tpu.memory_space<vmem>>, vector<1x128x128xbf16>
    %80 = vector.shape_cast %79 : vector<1x128x128xbf16> to vector<128x128xbf16>
    %cst_18 = arith.constant dense<0.000000e+00> : vector<8x128xf32>
    %81 = tpu.matmul %78, %80, %cst_18 {dimension_numbers = #tpu.dot_dimension_numbers<[1], [0], [0], [1], [0, 0, 1, 1], [], []>} : vector<8x128xbf16>, vector<128x128xbf16>, vector<8x128xf32> -> vector<8x128xf32>
    %c0_19 = arith.constant 0 : index
    %c0_20 = arith.constant 0 : index
    %c0_21 = arith.constant 0 : index
    %82 = vector.load %arg9[%c0_19, %c0_20, %c0_21] : memref<1x1x128xf32, #tpu.memory_space<vmem>>, vector<1x1x128xf32>
    %83 = vector.shape_cast %82 : vector<1x1x128xf32> to vector<1x128xf32>
    %84 = vector.broadcast %83 : vector<1x128xf32> to vector<8x128xf32>
    %85 = arith.addf %81, %84 : vector<8x128xf32>
    %86 = arith.addf %3, %85 : vector<8x128xf32>
    %c0_22 = arith.constant 0 : index
    %c0_23 = arith.constant 0 : index
    %c0_24 = arith.constant 0 : index
    %87 = vector.load %arg10[%c0_22, %c0_23, %c0_24] : memref<1x1x128xf32, #tpu.memory_space<vmem>>, vector<1x1x128xf32>
    %88 = vector.shape_cast %87 : vector<1x1x128xf32> to vector<1x128xf32>
    %c0_25 = arith.constant 0 : index
    %c0_26 = arith.constant 0 : index
    %c0_27 = arith.constant 0 : index
    %89 = vector.load %arg11[%c0_25, %c0_26, %c0_27] : memref<1x1x128xf32, #tpu.memory_space<vmem>>, vector<1x1x128xf32>
    %90 = vector.shape_cast %89 : vector<1x1x128xf32> to vector<1x128xf32>
    %cst_28 = arith.constant dense<0.000000e+00> : vector<8xf32>
    %91 = vector.multi_reduction <add>, %86, %cst_28 [1] : vector<8x128xf32> to vector<8xf32>
    %92 = vector.shape_cast %91 : vector<8xf32> to vector<8x1xf32>
    %cst_29 = arith.constant 1.280000e+02 : f32
    %93 = vector.broadcast %cst_29 : f32 to vector<8x1xf32>
    %94 = arith.divf %92, %93 : vector<8x1xf32>
    %95 = arith.mulf %86, %86 : vector<8x128xf32>
    %cst_30 = arith.constant dense<0.000000e+00> : vector<8xf32>
    %96 = vector.multi_reduction <add>, %95, %cst_30 [1] : vector<8x128xf32> to vector<8xf32>
    %97 = vector.shape_cast %96 : vector<8xf32> to vector<8x1xf32>
    %cst_31 = arith.constant 1.280000e+02 : f32
    %98 = vector.broadcast %cst_31 : f32 to vector<8x1xf32>
    %99 = arith.divf %97, %98 : vector<8x1xf32>
    %100 = arith.mulf %94, %94 : vector<8x1xf32>
    %101 = arith.subf %99, %100 : vector<8x1xf32>
    %cst_32 = arith.constant 0.000000e+00 : f32
    %102 = vector.broadcast %cst_32 : f32 to vector<8x1xf32>
    %103 = arith.maximumf %101, %102 : vector<8x1xf32>
    %104 = vector.broadcast %94 : vector<8x1xf32> to vector<8x128xf32>
    %105 = arith.subf %86, %104 : vector<8x128xf32>
    %cst_33 = arith.constant 9.99999996E-13 : f32
    %106 = vector.broadcast %cst_33 : f32 to vector<8x1xf32>
    %107 = arith.addf %103, %106 : vector<8x1xf32>
    %108 = math.rsqrt %107 : vector<8x1xf32>
    %109 = vector.broadcast %108 : vector<8x1xf32> to vector<8x128xf32>
    %110 = arith.mulf %105, %109 : vector<8x128xf32>
    %111 = vector.broadcast %88 : vector<1x128xf32> to vector<8x128xf32>
    %112 = arith.mulf %110, %111 : vector<8x128xf32>
    %113 = vector.broadcast %90 : vector<1x128xf32> to vector<8x128xf32>
    %114 = arith.addf %112, %113 : vector<8x128xf32>
    %115 = arith.truncf %114 : vector<8x128xf32> to vector<8x128xbf16>
    %c0_34 = arith.constant 0 : index
    %c0_35 = arith.constant 0 : index
    %c0_36 = arith.constant 0 : index
    %116 = vector.load %arg12[%c0_34, %c0_35, %c0_36] : memref<1x128x256xbf16, #tpu.memory_space<vmem>>, vector<1x128x256xbf16>
    %117 = vector.shape_cast %116 : vector<1x128x256xbf16> to vector<128x256xbf16>
    %cst_37 = arith.constant dense<0.000000e+00> : vector<8x256xf32>
    %118 = tpu.matmul %115, %117, %cst_37 {dimension_numbers = #tpu.dot_dimension_numbers<[1], [0], [0], [1], [0, 0, 1, 1], [], []>} : vector<8x128xbf16>, vector<128x256xbf16>, vector<8x256xf32> -> vector<8x256xf32>
    %c0_38 = arith.constant 0 : index
    %c0_39 = arith.constant 0 : index
    %c0_40 = arith.constant 0 : index
    %119 = vector.load %arg13[%c0_38, %c0_39, %c0_40] : memref<1x1x256xf32, #tpu.memory_space<vmem>>, vector<1x1x256xf32>
    %120 = vector.shape_cast %119 : vector<1x1x256xf32> to vector<1x256xf32>
    %121 = vector.broadcast %120 : vector<1x256xf32> to vector<8x256xf32>
    %122 = arith.addf %118, %121 : vector<8x256xf32>
    %cst_41 = arith.constant 5.000000e-01 : f32
    %123 = vector.broadcast %cst_41 : f32 to vector<8x256xf32>
    %124 = arith.mulf %123, %122 : vector<8x256xf32>
    %cst_42 = arith.constant 4.471500e-02 : f32
    %125 = vector.broadcast %cst_42 : f32 to vector<8x256xf32>
    %126 = arith.mulf %125, %122 : vector<8x256xf32>
    %127 = arith.mulf %126, %122 : vector<8x256xf32>
    %128 = arith.mulf %127, %122 : vector<8x256xf32>
    %129 = arith.addf %122, %128 : vector<8x256xf32>
    %cst_43 = arith.constant 0.797884583 : f32
    %130 = vector.broadcast %cst_43 : f32 to vector<8x256xf32>
    %131 = arith.mulf %130, %129 : vector<8x256xf32>
    %132 = math.tanh %131 : vector<8x256xf32>
    %cst_44 = arith.constant 1.000000e+00 : f32
    %133 = vector.broadcast %cst_44 : f32 to vector<8x256xf32>
    %134 = arith.addf %133, %132 : vector<8x256xf32>
    %135 = arith.mulf %124, %134 : vector<8x256xf32>
    %136 = arith.truncf %135 : vector<8x256xf32> to vector<8x256xbf16>
    %c0_45 = arith.constant 0 : index
    %c0_46 = arith.constant 0 : index
    %c0_47 = arith.constant 0 : index
    %137 = vector.load %arg14[%c0_45, %c0_46, %c0_47] : memref<1x256x128xbf16, #tpu.memory_space<vmem>>, vector<1x256x128xbf16>
    %138 = vector.shape_cast %137 : vector<1x256x128xbf16> to vector<256x128xbf16>
    %cst_48 = arith.constant dense<0.000000e+00> : vector<8x128xf32>
    %139 = tpu.matmul %136, %138, %cst_48 {dimension_numbers = #tpu.dot_dimension_numbers<[1], [0], [0], [1], [0, 0, 1, 1], [], []>} : vector<8x256xbf16>, vector<256x128xbf16>, vector<8x128xf32> -> vector<8x128xf32>
    %c0_49 = arith.constant 0 : index
    %c0_50 = arith.constant 0 : index
    %c0_51 = arith.constant 0 : index
    %140 = vector.load %arg15[%c0_49, %c0_50, %c0_51] : memref<1x1x128xf32, #tpu.memory_space<vmem>>, vector<1x1x128xf32>
    %141 = vector.shape_cast %140 : vector<1x1x128xf32> to vector<1x128xf32>
    %142 = vector.broadcast %141 : vector<1x128xf32> to vector<8x128xf32>
    %143 = arith.addf %139, %142 : vector<8x128xf32>
    %144 = arith.addf %114, %143 : vector<8x128xf32>
    %c0_52 = arith.constant 0 : index
    %c0_53 = arith.constant 0 : index
    %c0_54 = arith.constant 0 : index
    %145 = vector.load %arg16[%c0_52, %c0_53, %c0_54] : memref<1x1x128xf32, #tpu.memory_space<vmem>>, vector<1x1x128xf32>
    %146 = vector.shape_cast %145 : vector<1x1x128xf32> to vector<1x128xf32>
    %c0_55 = arith.constant 0 : index
    %c0_56 = arith.constant 0 : index
    %c0_57 = arith.constant 0 : index
    %147 = vector.load %arg17[%c0_55, %c0_56, %c0_57] : memref<1x1x128xf32, #tpu.memory_space<vmem>>, vector<1x1x128xf32>
    %148 = vector.shape_cast %147 : vector<1x1x128xf32> to vector<1x128xf32>
    %cst_58 = arith.constant dense<0.000000e+00> : vector<8xf32>
    %149 = vector.multi_reduction <add>, %144, %cst_58 [1] : vector<8x128xf32> to vector<8xf32>
    %150 = vector.shape_cast %149 : vector<8xf32> to vector<8x1xf32>
    %cst_59 = arith.constant 1.280000e+02 : f32
    %151 = vector.broadcast %cst_59 : f32 to vector<8x1xf32>
    %152 = arith.divf %150, %151 : vector<8x1xf32>
    %153 = arith.mulf %144, %144 : vector<8x128xf32>
    %cst_60 = arith.constant dense<0.000000e+00> : vector<8xf32>
    %154 = vector.multi_reduction <add>, %153, %cst_60 [1] : vector<8x128xf32> to vector<8xf32>
    %155 = vector.shape_cast %154 : vector<8xf32> to vector<8x1xf32>
    %cst_61 = arith.constant 1.280000e+02 : f32
    %156 = vector.broadcast %cst_61 : f32 to vector<8x1xf32>
    %157 = arith.divf %155, %156 : vector<8x1xf32>
    %158 = arith.mulf %152, %152 : vector<8x1xf32>
    %159 = arith.subf %157, %158 : vector<8x1xf32>
    %cst_62 = arith.constant 0.000000e+00 : f32
    %160 = vector.broadcast %cst_62 : f32 to vector<8x1xf32>
    %161 = arith.maximumf %159, %160 : vector<8x1xf32>
    %162 = vector.broadcast %152 : vector<8x1xf32> to vector<8x128xf32>
    %163 = arith.subf %144, %162 : vector<8x128xf32>
    %cst_63 = arith.constant 9.99999996E-13 : f32
    %164 = vector.broadcast %cst_63 : f32 to vector<8x1xf32>
    %165 = arith.addf %161, %164 : vector<8x1xf32>
    %166 = math.rsqrt %165 : vector<8x1xf32>
    %167 = vector.broadcast %166 : vector<8x1xf32> to vector<8x128xf32>
    %168 = arith.mulf %163, %167 : vector<8x128xf32>
    %169 = vector.broadcast %146 : vector<1x128xf32> to vector<8x128xf32>
    %170 = arith.mulf %168, %169 : vector<8x128xf32>
    %171 = vector.broadcast %148 : vector<1x128xf32> to vector<8x128xf32>
    %172 = arith.addf %170, %171 : vector<8x128xf32>
    %c0_64 = arith.constant 0 : index
    %c0_65 = arith.constant 0 : index
    %173 = vector.load %arg21[%c0_64, %c0_65] : memref<8x128xf32, #tpu.memory_space<vmem>>, vector<8x128xf32>
    tpu.vector_store %arg21[%c0_64, %c0_65], %172 {strides = array<i32>} : memref<8x128xf32, #tpu.memory_space<vmem>>, vector<8x128xf32>,
    %c1_i32 = arith.constant 1 : i32
    %174 = arith.cmpi eq, %arg1, %c1_i32 : i32
    %175 = arith.extui %174 : i1 to i32
    %c0_i32_66 = arith.constant 0 : i32
    %176 = arith.cmpi ne, %175, %c0_i32_66 : i32
    scf.if %176 {
      %c0_67 = arith.constant 0 : index
      %c0_68 = arith.constant 0 : index
      %177 = vector.load %arg18[%c0_67, %c0_68] : memref<128x128xf32, #tpu.memory_space<vmem>>, vector<128x128xf32>
      %cst_69 = arith.constant dense<0.000000e+00> : vector<8x128xf32>
      %178 = tpu.matmul %172, %177, %cst_69 {dimension_numbers = #tpu.dot_dimension_numbers<[1], [0], [0], [1], [0, 0, 1, 1], [], []>} : vector<8x128xf32>, vector<128x128xf32>, vector<8x128xf32> -> vector<8x128xf32>
      %c0_70 = arith.constant 0 : index
      %c0_71 = arith.constant 0 : index
      %179 = vector.load %arg19[%c0_70, %c0_71] : memref<1x128xf32, #tpu.memory_space<vmem>>, vector<1x128xf32>
      %180 = vector.broadcast %179 : vector<1x128xf32> to vector<8x128xf32>
      %181 = arith.addf %178, %180 : vector<8x128xf32>
      %c0_72 = arith.constant 0 : index
      %c0_73 = arith.constant 0 : index
      %c0_74 = arith.constant 0 : index
      %182 = vector.load %arg20[%c0_72, %c0_73, %c0_74] : memref<1x8x128xf32, #tpu.memory_space<vmem>>, vector<1x8x128xf32>
      %183 = vector.shape_cast %182 : vector<1x8x128xf32> to vector<8x128xf32>
      %184 = vector.shape_cast %181 : vector<8x128xf32> to vector<1x8x128xf32>
      tpu.vector_store %arg20[%c0_72, %c0_73, %c0_74], %184 {strides = array<i32>} : memref<1x8x128xf32, #tpu.memory_space<vmem>>, vector<1x8x128xf32>,
    } else {
    }
    return
  }
  func.func @transform_0(%arg0: i32, %arg1: i32, %arg2: memref<2xi32, #tpu.memory_space<smem>>) -> (i32, i32, i32) {
    %c0_i32 = arith.constant 0 : i32
    %c0_i32_0 = arith.constant 0 : i32
    %c0_i32_1 = arith.constant 0 : i32
    return %arg0, %c0_i32, %c0_i32_0 : i32, i32, i32
  }
  func.func @transform_1(%arg0: i32, %arg1: i32, %arg2: memref<2xi32, #tpu.memory_space<smem>>) -> (i32, i32) {
    %c0_i32 = arith.constant 0 : i32
    %c0_i32_0 = arith.constant 0 : i32
    %c0_i32_1 = arith.constant 0 : i32
    return %c0_i32, %c0_i32_0 : i32, i32
  }
  func.func @transform_2(%arg0: i32, %arg1: i32, %arg2: memref<2xi32, #tpu.memory_space<smem>>) -> (i32, i32) {
    %c0_i32 = arith.constant 0 : i32
    %c0_i32_0 = arith.constant 0 : i32
    %c0_i32_1 = arith.constant 0 : i32
    return %c0_i32, %c0_i32_0 : i32, i32
  }
  func.func @transform_3(%arg0: i32, %arg1: i32, %arg2: memref<2xi32, #tpu.memory_space<smem>>) -> (i32, i32, i32) {
    %c0_i32 = arith.constant 0 : i32
    %c0_i32_0 = arith.constant 0 : i32
    %c0_i32_1 = arith.constant 0 : i32
    return %arg1, %c0_i32, %c0_i32_0 : i32, i32, i32
  }
  func.func @transform_4(%arg0: i32, %arg1: i32, %arg2: memref<2xi32, #tpu.memory_space<smem>>) -> (i32, i32, i32) {
    %c0_i32 = arith.constant 0 : i32
    %c0_i32_0 = arith.constant 0 : i32
    %c0_i32_1 = arith.constant 0 : i32
    return %arg1, %c0_i32, %c0_i32_0 : i32, i32, i32
  }
  func.func @transform_5(%arg0: i32, %arg1: i32, %arg2: memref<2xi32, #tpu.memory_space<smem>>) -> (i32, i32, i32) {
    %c0_i32 = arith.constant 0 : i32
    %c0_i32_0 = arith.constant 0 : i32
    %c0_i32_1 = arith.constant 0 : i32
    return %arg1, %c0_i32, %c0_i32_0 : i32, i32, i32
  }
  func.func @transform_6(%arg0: i32, %arg1: i32, %arg2: memref<2xi32, #tpu.memory_space<smem>>) -> (i32, i32, i32) {
    %c0_i32 = arith.constant 0 : i32
    %c0_i32_0 = arith.constant 0 : i32
    %c0_i32_1 = arith.constant 0 : i32
    return %arg1, %c0_i32, %c0_i32_0 : i32, i32, i32
  }
  func.func @transform_7(%arg0: i32, %arg1: i32, %arg2: memref<2xi32, #tpu.memory_space<smem>>) -> (i32, i32, i32) {
    %c0_i32 = arith.constant 0 : i32
    %c0_i32_0 = arith.constant 0 : i32
    %c0_i32_1 = arith.constant 0 : i32
    return %arg1, %c0_i32, %c0_i32_0 : i32, i32, i32
  }
  func.func @transform_8(%arg0: i32, %arg1: i32, %arg2: memref<2xi32, #tpu.memory_space<smem>>) -> (i32, i32, i32) {
    %c0_i32 = arith.constant 0 : i32
    %c0_i32_0 = arith.constant 0 : i32
    %c0_i32_1 = arith.constant 0 : i32
    return %arg1, %c0_i32, %c0_i32_0 : i32, i32, i32
  }
  func.func @transform_9(%arg0: i32, %arg1: i32, %arg2: memref<2xi32, #tpu.memory_space<smem>>) -> (i32, i32, i32) {
    %c0_i32 = arith.constant 0 : i32
    %c0_i32_0 = arith.constant 0 : i32
    %c0_i32_1 = arith.constant 0 : i32
    return %arg1, %c0_i32, %c0_i32_0 : i32, i32, i32
  }
  func.func @transform_10(%arg0: i32, %arg1: i32, %arg2: memref<2xi32, #tpu.memory_space<smem>>) -> (i32, i32, i32) {
    %c0_i32 = arith.constant 0 : i32
    %c0_i32_0 = arith.constant 0 : i32
    %c0_i32_1 = arith.constant 0 : i32
    return %arg1, %c0_i32, %c0_i32_0 : i32, i32, i32
  }
  func.func @transform_11(%arg0: i32, %arg1: i32, %arg2: memref<2xi32, #tpu.memory_space<smem>>) -> (i32, i32, i32) {
    %c0_i32 = arith.constant 0 : i32
    %c0_i32_0 = arith.constant 0 : i32
    %c0_i32_1 = arith.constant 0 : i32
    return %arg1, %c0_i32, %c0_i32_0 : i32, i32, i32
  }
  func.func @transform_12(%arg0: i32, %arg1: i32, %arg2: memref<2xi32, #tpu.memory_space<smem>>) -> (i32, i32, i32) {
    %c0_i32 = arith.constant 0 : i32
    %c0_i32_0 = arith.constant 0 : i32
    %c0_i32_1 = arith.constant 0 : i32
    return %arg1, %c0_i32, %c0_i32_0 : i32, i32, i32
  }
  func.func @transform_13(%arg0: i32, %arg1: i32, %arg2: memref<2xi32, #tpu.memory_space<smem>>) -> (i32, i32, i32) {
    %c0_i32 = arith.constant 0 : i32
    %c0_i32_0 = arith.constant 0 : i32
    %c0_i32_1 = arith.constant 0 : i32
    return %arg1, %c0_i32, %c0_i32_0 : i32, i32, i32
  }
  func.func @transform_14(%arg0: i32, %arg1: i32, %arg2: memref<2xi32, #tpu.memory_space<smem>>) -> (i32, i32, i32) {
    %c0_i32 = arith.constant 0 : i32
    %c0_i32_0 = arith.constant 0 : i32
    %c0_i32_1 = arith.constant 0 : i32
    return %arg1, %c0_i32, %c0_i32_0 : i32, i32, i32
  }
  func.func @transform_15(%arg0: i32, %arg1: i32, %arg2: memref<2xi32, #tpu.memory_space<smem>>) -> (i32, i32) {
    %c0_i32 = arith.constant 0 : i32
    %c0_i32_0 = arith.constant 0 : i32
    %c0_i32_1 = arith.constant 0 : i32
    return %c0_i32, %c0_i32_0 : i32, i32
  }
  func.func @transform_16(%arg0: i32, %arg1: i32, %arg2: memref<2xi32, #tpu.memory_space<smem>>) -> (i32, i32) {
    %c0_i32 = arith.constant 0 : i32
    %c0_i32_0 = arith.constant 0 : i32
    %c0_i32_1 = arith.constant 0 : i32
    return %c0_i32, %c0_i32_0 : i32, i32
  }
  func.func @transform_17(%arg0: i32, %arg1: i32, %arg2: memref<2xi32, #tpu.memory_space<smem>>) -> (i32, i32, i32) {
    %c0_i32 = arith.constant 0 : i32
    %c0_i32_0 = arith.constant 0 : i32
    %c0_i32_1 = arith.constant 0 : i32
    return %arg0, %c0_i32, %c0_i32_0 : i32, i32, i32
  }
}

</mosaic_0001>

<llo_original>
// kernel: bert_encoder_forward.1
$region0: #{bert_encoder_forward.1}
  #allocation0 [shape = 'u32[]', space=smem, size = 0x4, offset = 0x4, fixed_abs, tag = 'smem constant byte address 0x4 - core index']
  #allocation1 [shape = 'u32[72,128]{1,0:T(1,128)}', space=vmem, size = 0x9000, scoped, tag = 'internal scratch']
  #allocation2 [shape = 'f32[8,128]{1,0:T(8,128)}', space=vmem, size = 0x1000, scoped, tag = 'scratch operand']
  #allocation3 [shape = 's32[1]{0}', space=sflag, size = 0x4, scoped, tag = 'scoped memory for bert_encoder_forward.1']
  #allocation4 [shape = 'u8[512]{0}', space=smem, size = 0x200, scoped, tag = 'prefetched SMEM operand 0']
  %s0 = inlined_call_operand.vmem [shape: s32[2], index: 0, kind: input, shape index: {}]
  %s1 = inlined_call_operand.vmem [shape: f32[2,8,128], index: 1, kind: input, shape index: {}]
  %s2 = inlined_call_operand.vmem [shape: f32[1,128], index: 2, kind: input, shape index: {}]
  %s3 = inlined_call_operand.vmem [shape: f32[1,128], index: 3, kind: input, shape index: {}]
  %s4 = inlined_call_operand.hbm [shape: bf16[2,128,384], index: 4, kind: input, shape index: {}]
  %s5 = inlined_call_operand.vmem [shape: f32[2,1,384], index: 5, kind: input, shape index: {}]
  %s6 = inlined_call_operand.vmem [shape: bf16[2,128,128], index: 6, kind: input, shape index: {}]
  %s7 = inlined_call_operand.vmem [shape: f32[2,1,128], index: 7, kind: input, shape index: {}]
  %s8 = inlined_call_operand.vmem [shape: f32[2,1,128], index: 8, kind: input, shape index: {}]
  %s9 = inlined_call_operand.vmem [shape: f32[2,1,128], index: 9, kind: input, shape index: {}]
  %s10 = inlined_call_operand.hbm [shape: bf16[2,128,256], index: 10, kind: input, shape index: {}]
  %s11 = inlined_call_operand.vmem [shape: f32[2,1,256], index: 11, kind: input, shape index: {}]
  %s12 = inlined_call_operand.hbm [shape: bf16[2,256,128], index: 12, kind: input, shape index: {}]
  %s13 = inlined_call_operand.vmem [shape: f32[2,1,128], index: 13, kind: input, shape index: {}]
  %s14 = inlined_call_operand.vmem [shape: f32[2,1,128], index: 14, kind: input, shape index: {}]
  %s15 = inlined_call_operand.vmem [shape: f32[2,1,128], index: 15, kind: input, shape index: {}]
  %s16 = inlined_call_operand.hbm [shape: f32[128,128], index: 16, kind: input, shape index: {}]
  %s17 = inlined_call_operand.vmem [shape: f32[1,128], index: 17, kind: input, shape index: {}]
  %s18 = inlined_call_operand.vmem [shape: f32[2,8,128], index: 18, kind: output, shape index: {}]
  %s19 = sld [smem:[#allocation0]]
  $region125: #{bert_encoder_forward.1} parent=0
    _
  %s21 = ssub.s32 1, %s19
  %s22 = scalar_select 0, %s21, %s19
  %s24 = sshll.u32 %s0, 4
  %s25 = int_to_ptr.vmem [resolvable:$true] %s24
  %27 = dma.vmem_to_smem %s25, 16, [#allocation4], [#allocation3]
  %29 = dma.done [#allocation3], 16
  %30 = sfence
  $region1: #{bert_encoder_forward.1} parent=0
    #allocation5 [shape = 'u8[196608]{0}', space=vmem, size = 0x30000, scoped, tag = 'input window, operand 4']
    #allocation6 [shape = 's32[2]{0}', space=sflag, size = 0x8, scoped, tag = 'scoped memory for bert_encoder_forward.1']
    #allocation7 [shape = 'u8[131072]{0}', space=vmem, size = 0x20000, scoped, tag = 'input window, operand 10']
    #allocation8 [shape = 's32[2]{0}', space=sflag, size = 0x8, scoped, tag = 'scoped memory for bert_encoder_forward.1']
    #allocation9 [shape = 'u8[131072]{0}', space=vmem, size = 0x20000, scoped, tag = 'input window, operand 12']
    #allocation10 [shape = 'u8[65536]{0}', space=vmem, size = 0x10000, scoped, tag = 'input window, operand 16, single buffered']
    #allocation11 [shape = 's32[1]{0}', space=sflag, size = 0x4, scoped, tag = 'scoped memory for bert_encoder_forward.1']
    %31 = vsyncpa [#allocation6], 0
    %s32 = scalar_lea.sflag [#allocation6], 1
    %33 = vsyncpa %s32, 0
    %34 = vsyncpa [#allocation8], 0
    %s35 = scalar_lea.sflag [#allocation8], 1
    %36 = vsyncpa %s35, 0
    %37 = vsyncpa [#allocation11], 0
    loop: start=0, step=1, limit=6
    $region2: #{bert_encoder_forward.1} parent=1 // loop_pre_header
      _
    $region3: #{bert_encoder_forward.1} parent=1 // loop_header
      %s39 = sphi 0, %s43
      %p40 = scmp.ge.s32.totalorder %s39, 6
      %s46 = sphi 0, %s58
      %s47 = sphi 0, %s54
      %s48 = sphi 0, %s46
      %s49 = sphi 0, %s47
      %s50 = sphi 0, %s48
      %s51 = sphi 0, %s49
      %s61 = sphi 0, %s63
      %s64 = sphi 0, %s61
      %s65 = sphi 0, %s64
      %s81 = sphi 0, %s65
      %s85 = sphi 0, %s85
      %s87 = sphi 0, %s85
      %s88 = sphi 0, %s87
      %s102 = sphi 0, %s88
      %s106 = sphi 0, %s106
      %s108 = sphi 0, %s106
      %s109 = sphi 0, %s108
      %s123 = sphi 0, %s109
      %s129 = sphi 0, %s131
      %s132 = sphi 0, %s129
      %s133 = sphi 0, %s132
      %s149 = sphi 0, %s133
      %s155 = sphi 0, %s157
      %s158 = sphi 0, %s155
      %s159 = sphi 0, %s158
      %s175 = sphi 0, %s159
      %s181 = sphi 0, %s183
      %s184 = sphi 0, %s181
      %s185 = sphi 0, %s184
      %s201 = sphi 0, %s185
      %s207 = sphi 0, %s209
      %s210 = sphi 0, %s207
      %s211 = sphi 0, %s210
      %s227 = sphi 0, %s211
      %s233 = sphi 0, %s235
      %s236 = sphi 0, %s233
      %s237 = sphi 0, %s236
      %s253 = sphi 0, %s237
      %s259 = sphi 0, %s261
      %s262 = sphi 0, %s259
      %s263 = sphi 0, %s262
      %s279 = sphi 0, %s263
      %s285 = sphi 0, %s287
      %s288 = sphi 0, %s285
      %s289 = sphi 0, %s288
      %s305 = sphi 0, %s289
      %s311 = sphi 0, %s313
      %s314 = sphi 0, %s311
      %s315 = sphi 0, %s314
      %s331 = sphi 0, %s315
      %s337 = sphi 0, %s339
      %s340 = sphi 0, %s337
      %s341 = sphi 0, %s340
      %s357 = sphi 0, %s341
      %s363 = sphi 0, %s365
      %s366 = sphi 0, %s363
      %s367 = sphi 0, %s366
      %s383 = sphi 0, %s367
      %s389 = sphi 0, %s391
      %s392 = sphi 0, %s389
      %s393 = sphi 0, %s392
      %s409 = sphi 0, %s393
      %s415 = sphi 0, %s417
      %s418 = sphi 0, %s415
      %s419 = sphi 0, %s418
      %s435 = sphi 0, %s419
      %s439 = sphi 0, %s439
      %s441 = sphi 0, %s439
      %s442 = sphi 0, %s441
      %s456 = sphi 0, %s442
      %s460 = sphi 0, %s460
      %s462 = sphi 0, %s460
      %s463 = sphi 0, %s462
      %s477 = sphi 0, %s463
      %s483 = sphi 0, %s485
      %s486 = sphi 0, %s483
      %s487 = sphi 0, %s486
      %s503 = sphi 0, %s487
    $region4: #{bert_encoder_forward.1} parent=1 // loop_header_branch
      %42 = sbr.rel (%p40) target = $region8
    $region5: #{bert_encoder_forward.1} parent=1 // loop_body
      %s44 = ssub.s32 %s39, 1
      %s45 = ssub.s32 %s39, 2
      %s52 = sadd.s32 1, %s47
      %p53 = scmp.ge.s32.totalorder %s52, 2
      %s54 = scalar_select %p53, 0, %s52
      %s55 = sadd.s32 1, %s46
      %s56 = scalar_select %p53, %s55, %s46
      %p57 = scmp.ge.s32.totalorder %s56, 2
      %s58 = scalar_select %p57, 0, %s56
      %s59 = ssub.s32 %s46, %s58
      %p60 = scmp.eq.s32.totalorder %s59, 0
      %s62 = sadd.s32 %s61, 1
      %s63 = scalar_select %p60, %s61, %s62
      %p66 = pneg %p60
      %p67 = scmp.eq.s32.totalorder %s39, 3
      %p68 = por %p66, %p67
      %p69 = scmp.ne.s32.totalorder %s61, %s64
      %p70 = scmp.eq.s32.totalorder %s39, 0
      %p71 = por %p69, %p70
      %p72 = scmp.ne.s32.totalorder %s61, %s64
      %p73 = scmp.eq.s32.totalorder %s44, 3
      %p74 = por %p72, %p73
      %p75 = scmp.ne.s32.totalorder %s64, %s65
      %p76 = scmp.eq.s32.totalorder %s44, 0
      %p77 = por %p75, %p76
      %p78 = scmp.ne.s32.totalorder %s64, %s65
      %p79 = scmp.eq.s32.totalorder %s45, 3
      %p80 = por %p78, %p79
      %p82 = scmp.ne.s32.totalorder %s65, %s81
      %p83 = scmp.eq.s32.totalorder %s45, 0
      %p84 = por %p82, %p83
      %s86 = sadd.s32 %s85, 1
      %p89 = scmp.eq.s32.totalorder %s39, 3
      %p90 = scmp.ne.s32.totalorder %s85, %s87
      %p91 = scmp.eq.s32.totalorder %s39, 0
      %p92 = por %p90, %p91
      %p93 = scmp.ne.s32.totalorder %s85, %s87
      %p94 = scmp.eq.s32.totalorder %s44, 3
      %p95 = por %p93, %p94
      %p96 = scmp.ne.s32.totalorder %s87, %s88
      %p97 = scmp.eq.s32.totalorder %s44, 0
      %p98 = por %p96, %p97
      %p99 = scmp.ne.s32.totalorder %s87, %s88
      %p100 = scmp.eq.s32.totalorder %s45, 3
      %p101 = por %p99, %p100
      %p103 = scmp.ne.s32.totalorder %s88, %s102
      %p104 = scmp.eq.s32.totalorder %s45, 0
      %p105 = por %p103, %p104
      %s107 = sadd.s32 %s106, 1
      %p110 = scmp.eq.s32.totalorder %s39, 3
      %p111 = scmp.ne.s32.totalorder %s106, %s108
      %p112 = scmp.eq.s32.totalorder %s39, 0
      %p113 = por %p111, %p112
      %p114 = scmp.ne.s32.totalorder %s106, %s108
      %p115 = scmp.eq.s32.totalorder %s44, 3
      %p116 = por %p114, %p115
      %p117 = scmp.ne.s32.totalorder %s108, %s109
      %p118 = scmp.eq.s32.totalorder %s44, 0
      %p119 = por %p117, %p118
      %p120 = scmp.ne.s32.totalorder %s108, %s109
      %p121 = scmp.eq.s32.totalorder %s45, 3
      %p122 = por %p120, %p121
      %p124 = scmp.ne.s32.totalorder %s109, %s123
      %p125 = scmp.eq.s32.totalorder %s45, 0
      %p126 = por %p124, %p125
      %s127 = ssub.s32 %s47, %s54
      %p128 = scmp.eq.s32.totalorder %s127, 0
      %s130 = sadd.s32 %s129, 1
      %s131 = scalar_select %p128, %s129, %s130
      %p134 = pneg %p128
      %p135 = scmp.eq.s32.totalorder %s39, 3
      %p136 = por %p134, %p135
      %p137 = scmp.ne.s32.totalorder %s129, %s132
      %p138 = scmp.eq.s32.totalorder %s39, 0
      %p139 = por %p137, %p138
      %p140 = scmp.ne.s32.totalorder %s129, %s132
      %p141 = scmp.eq.s32.totalorder %s44, 3
      %p142 = por %p140, %p141
      %p143 = scmp.ne.s32.totalorder %s132, %s133
      %p144 = scmp.eq.s32.totalorder %s44, 0
      %p145 = por %p143, %p144
      %p146 = scmp.ne.s32.totalorder %s132, %s133
      %p147 = scmp.eq.s32.totalorder %s45, 3
      %p148 = por %p146, %p147
      %p150 = scmp.ne.s32.totalorder %s133, %s149
      %p151 = scmp.eq.s32.totalorder %s45, 0
      %p152 = por %p150, %p151
      %s153 = ssub.s32 %s47, %s54
      %p154 = scmp.eq.s32.totalorder %s153, 0
      %s156 = sadd.s32 %s155, 1
      %s157 = scalar_select %p154, %s155, %s156
      %p160 = pneg %p154
      %p161 = scmp.eq.s32.totalorder %s39, 3
      %p162 = por %p160, %p161
      %p163 = scmp.ne.s32.totalorder %s155, %s158
      %p164 = scmp.eq.s32.totalorder %s39, 0
      %p165 = por %p163, %p164
      %p166 = scmp.ne.s32.totalorder %s155, %s158
      %p167 = scmp.eq.s32.totalorder %s44, 3
      %p168 = por %p166, %p167
      %p169 = scmp.ne.s32.totalorder %s158, %s159
      %p170 = scmp.eq.s32.totalorder %s44, 0
      %p171 = por %p169, %p170
      %p172 = scmp.ne.s32.totalorder %s158, %s159
      %p173 = scmp.eq.s32.totalorder %s45, 3
      %p174 = por %p172, %p173
      %p176 = scmp.ne.s32.totalorder %s159, %s175
      %p177 = scmp.eq.s32.totalorder %s45, 0
      %p178 = por %p176, %p177
      %s179 = ssub.s32 %s47, %s54
      %p180 = scmp.eq.s32.totalorder %s179, 0
      %s182 = sadd.s32 %s181, 1
      %s183 = scalar_select %p180, %s181, %s182
      %p186 = pneg %p180
      %p187 = scmp.eq.s32.totalorder %s39, 3
      %p188 = por %p186, %p187
      %p189 = scmp.ne.s32.totalorder %s181, %s184
      %p190 = scmp.eq.s32.totalorder %s39, 0
      %p191 = por %p189, %p190
      %p192 = scmp.ne.s32.totalorder %s181, %s184
      %p193 = scmp.eq.s32.totalorder %s44, 3
      %p194 = por %p192, %p193
      %p195 = scmp.ne.s32.totalorder %s184, %s185
      %p196 = scmp.eq.s32.totalorder %s44, 0
      %p197 = por %p195, %p196
      %p198 = scmp.ne.s32.totalorder %s184, %s185
      %p199 = scmp.eq.s32.totalorder %s45, 3
      %p200 = por %p198, %p199
      %p202 = scmp.ne.s32.totalorder %s185, %s201
      %p203 = scmp.eq.s32.totalorder %s45, 0
      %p204 = por %p202, %p203
      %s205 = ssub.s32 %s47, %s54
      %p206 = scmp.eq.s32.totalorder %s205, 0
      %s208 = sadd.s32 %s207, 1
      %s209 = scalar_select %p206, %s207, %s208
      %p212 = pneg %p206
      %p213 = scmp.eq.s32.totalorder %s39, 3
      %p214 = por %p212, %p213
      %p215 = scmp.ne.s32.totalorder %s207, %s210
      %p216 = scmp.eq.s32.totalorder %s39, 0
      %p217 = por %p215, %p216
      %p218 = scmp.ne.s32.totalorder %s207, %s210
      %p219 = scmp.eq.s32.totalorder %s44, 3
      %p220 = por %p218, %p219
      %p221 = scmp.ne.s32.totalorder %s210, %s211
      %p222 = scmp.eq.s32.totalorder %s44, 0
      %p223 = por %p221, %p222
      %p224 = scmp.ne.s32.totalorder %s210, %s211
      %p225 = scmp.eq.s32.totalorder %s45, 3
      %p226 = por %p224, %p225
      %p228 = scmp.ne.s32.totalorder %s211, %s227
      %p229 = scmp.eq.s32.totalorder %s45, 0
      %p230 = por %p228, %p229
      %s231 = ssub.s32 %s47, %s54
      %p232 = scmp.eq.s32.totalorder %s231, 0
      %s234 = sadd.s32 %s233, 1
      %s235 = scalar_select %p232, %s233, %s234
      %p238 = pneg %p232
      %p239 = scmp.eq.s32.totalorder %s39, 3
      %p240 = por %p238, %p239
      %p241 = scmp.ne.s32.totalorder %s233, %s236
      %p242 = scmp.eq.s32.totalorder %s39, 0
      %p243 = por %p241, %p242
      %p244 = scmp.ne.s32.totalorder %s233, %s236
      %p245 = scmp.eq.s32.totalorder %s44, 3
      %p246 = por %p244, %p245
      %p247 = scmp.ne.s32.totalorder %s236, %s237
      %p248 = scmp.eq.s32.totalorder %s44, 0
      %p249 = por %p247, %p248
      %p250 = scmp.ne.s32.totalorder %s236, %s237
      %p251 = scmp.eq.s32.totalorder %s45, 3
      %p252 = por %p250, %p251
      %p254 = scmp.ne.s32.totalorder %s237, %s253
      %p255 = scmp.eq.s32.totalorder %s45, 0
      %p256 = por %p254, %p255
      %s257 = ssub.s32 %s47, %s54
      %p258 = scmp.eq.s32.totalorder %s257, 0
      %s260 = sadd.s32 %s259, 1
      %s261 = scalar_select %p258, %s259, %s260
      %p264 = pneg %p258
      %p265 = scmp.eq.s32.totalorder %s39, 3
      %p266 = por %p264, %p265
      %p267 = scmp.ne.s32.totalorder %s259, %s262
      %p268 = scmp.eq.s32.totalorder %s39, 0
      %p269 = por %p267, %p268
      %p270 = scmp.ne.s32.totalorder %s259, %s262
      %p271 = scmp.eq.s32.totalorder %s44, 3
      %p272 = por %p270, %p271
      %p273 = scmp.ne.s32.totalorder %s262, %s263
      %p274 = scmp.eq.s32.totalorder %s44, 0
      %p275 = por %p273, %p274
      %p276 = scmp.ne.s32.totalorder %s262, %s263
      %p277 = scmp.eq.s32.totalorder %s45, 3
      %p278 = por %p276, %p277
      %p280 = scmp.ne.s32.totalorder %s263, %s279
      %p281 = scmp.eq.s32.totalorder %s45, 0
      %p282 = por %p280, %p281
      %s283 = ssub.s32 %s47, %s54
      %p284 = scmp.eq.s32.totalorder %s283, 0
      %s286 = sadd.s32 %s285, 1
      %s287 = scalar_select %p284, %s285, %s286
      %p290 = pneg %p284
      %p291 = scmp.eq.s32.totalorder %s39, 3
      %p292 = por %p290, %p291
      %p293 = scmp.ne.s32.totalorder %s285, %s288
      %p294 = scmp.eq.s32.totalorder %s39, 0
      %p295 = por %p293, %p294
      %p296 = scmp.ne.s32.totalorder %s285, %s288
      %p297 = scmp.eq.s32.totalorder %s44, 3
      %p298 = por %p296, %p297
      %p299 = scmp.ne.s32.totalorder %s288, %s289
      %p300 = scmp.eq.s32.totalorder %s44, 0
      %p301 = por %p299, %p300
      %p302 = scmp.ne.s32.totalorder %s288, %s289
      %p303 = scmp.eq.s32.totalorder %s45, 3
      %p304 = por %p302, %p303
      %p306 = scmp.ne.s32.totalorder %s289, %s305
      %p307 = scmp.eq.s32.totalorder %s45, 0
      %p308 = por %p306, %p307
      %s309 = ssub.s32 %s47, %s54
      %p310 = scmp.eq.s32.totalorder %s309, 0
      %s312 = sadd.s32 %s311, 1
      %s313 = scalar_select %p310, %s311, %s312
      %p316 = pneg %p310
      %p317 = scmp.eq.s32.totalorder %s39, 3
      %p318 = por %p316, %p317
      %p319 = scmp.ne.s32.totalorder %s311, %s314
      %p320 = scmp.eq.s32.totalorder %s39, 0
      %p321 = por %p319, %p320
      %p322 = scmp.ne.s32.totalorder %s311, %s314
      %p323 = scmp.eq.s32.totalorder %s44, 3
      %p324 = por %p322, %p323
      %p325 = scmp.ne.s32.totalorder %s314, %s315
      %p326 = scmp.eq.s32.totalorder %s44, 0
      %p327 = por %p325, %p326
      %p328 = scmp.ne.s32.totalorder %s314, %s315
      %p329 = scmp.eq.s32.totalorder %s45, 3
      %p330 = por %p328, %p329
      %p332 = scmp.ne.s32.totalorder %s315, %s331
      %p333 = scmp.eq.s32.totalorder %s45, 0
      %p334 = por %p332, %p333
      %s335 = ssub.s32 %s47, %s54
      %p336 = scmp.eq.s32.totalorder %s335, 0
      %s338 = sadd.s32 %s337, 1
      %s339 = scalar_select %p336, %s337, %s338
      %p342 = pneg %p336
      %p343 = scmp.eq.s32.totalorder %s39, 3
      %p344 = por %p342, %p343
      %p345 = scmp.ne.s32.totalorder %s337, %s340
      %p346 = scmp.eq.s32.totalorder %s39, 0
      %p347 = por %p345, %p346
      %p348 = scmp.ne.s32.totalorder %s337, %s340
      %p349 = scmp.eq.s32.totalorder %s44, 3
      %p350 = por %p348, %p349
      %p351 = scmp.ne.s32.totalorder %s340, %s341
      %p352 = scmp.eq.s32.totalorder %s44, 0
      %p353 = por %p351, %p352
      %p354 = scmp.ne.s32.totalorder %s340, %s341
      %p355 = scmp.eq.s32.totalorder %s45, 3
      %p356 = por %p354, %p355
      %p358 = scmp.ne.s32.totalorder %s341, %s357
      %p359 = scmp.eq.s32.totalorder %s45, 0
      %p360 = por %p358, %p359
      %s361 = ssub.s32 %s47, %s54
      %p362 = scmp.eq.s32.totalorder %s361, 0
      %s364 = sadd.s32 %s363, 1
      %s365 = scalar_select %p362, %s363, %s364
      %p368 = pneg %p362
      %p369 = scmp.eq.s32.totalorder %s39, 3
      %p370 = por %p368, %p369
      %p371 = scmp.ne.s32.totalorder %s363, %s366
      %p372 = scmp.eq.s32.totalorder %s39, 0
      %p373 = por %p371, %p372
      %p374 = scmp.ne.s32.totalorder %s363, %s366
      %p375 = scmp.eq.s32.totalorder %s44, 3
      %p376 = por %p374, %p375
      %p377 = scmp.ne.s32.totalorder %s366, %s367
      %p378 = scmp.eq.s32.totalorder %s44, 0
      %p379 = por %p377, %p378
      %p380 = scmp.ne.s32.totalorder %s366, %s367
      %p381 = scmp.eq.s32.totalorder %s45, 3
      %p382 = por %p380, %p381
      %p384 = scmp.ne.s32.totalorder %s367, %s383
      %p385 = scmp.eq.s32.totalorder %s45, 0
      %p386 = por %p384, %p385
      %s387 = ssub.s32 %s47, %s54
      %p388 = scmp.eq.s32.totalorder %s387, 0
      %s390 = sadd.s32 %s389, 1
      %s391 = scalar_select %p388, %s389, %s390
      %p394 = pneg %p388
      %p395 = scmp.eq.s32.totalorder %s39, 3
      %p396 = por %p394, %p395
      %p397 = scmp.ne.s32.totalorder %s389, %s392
      %p398 = scmp.eq.s32.totalorder %s39, 0
      %p399 = por %p397, %p398
      %p400 = scmp.ne.s32.totalorder %s389, %s392
      %p401 = scmp.eq.s32.totalorder %s44, 3
      %p402 = por %p400, %p401
      %p403 = scmp.ne.s32.totalorder %s392, %s393
      %p404 = scmp.eq.s32.totalorder %s44, 0
      %p405 = por %p403, %p404
      %p406 = scmp.ne.s32.totalorder %s392, %s393
      %p407 = scmp.eq.s32.totalorder %s45, 3
      %p408 = por %p406, %p407
      %p410 = scmp.ne.s32.totalorder %s393, %s409
      %p411 = scmp.eq.s32.totalorder %s45, 0
      %p412 = por %p410, %p411
      %s413 = ssub.s32 %s47, %s54
      %p414 = scmp.eq.s32.totalorder %s413, 0
      %s416 = sadd.s32 %s415, 1
      %s417 = scalar_select %p414, %s415, %s416
      %p420 = pneg %p414
      %p421 = scmp.eq.s32.totalorder %s39, 3
      %p422 = por %p420, %p421
      %p423 = scmp.ne.s32.totalorder %s415, %s418
      %p424 = scmp.eq.s32.totalorder %s39, 0
      %p425 = por %p423, %p424
      %p426 = scmp.ne.s32.totalorder %s415, %s418
      %p427 = scmp.eq.s32.totalorder %s44, 3
      %p428 = por %p426, %p427
      %p429 = scmp.ne.s32.totalorder %s418, %s419
      %p430 = scmp.eq.s32.totalorder %s44, 0
      %p431 = por %p429, %p430
      %p432 = scmp.ne.s32.totalorder %s418, %s419
      %p433 = scmp.eq.s32.totalorder %s45, 3
      %p434 = por %p432, %p433
      %p436 = scmp.ne.s32.totalorder %s419, %s435
      %p437 = scmp.eq.s32.totalorder %s45, 0
      %p438 = por %p436, %p437
      %s440 = sadd.s32 %s439, 1
      %p443 = scmp.eq.s32.totalorder %s39, 3
      %p444 = scmp.ne.s32.totalorder %s439, %s441
      %p445 = scmp.eq.s32.totalorder %s39, 0
      %p446 = por %p444, %p445
      %p447 = scmp.ne.s32.totalorder %s439, %s441
      %p448 = scmp.eq.s32.totalorder %s44, 3
      %p449 = por %p447, %p448
      %p450 = scmp.ne.s32.totalorder %s441, %s442
      %p451 = scmp.eq.s32.totalorder %s44, 0
      %p452 = por %p450, %p451
      %p453 = scmp.ne.s32.totalorder %s441, %s442
      %p454 = scmp.eq.s32.totalorder %s45, 3
      %p455 = por %p453, %p454
      %p457 = scmp.ne.s32.totalorder %s442, %s456
      %p458 = scmp.eq.s32.totalorder %s45, 0
      %p459 = por %p457, %p458
      %s461 = sadd.s32 %s460, 1
      %p464 = scmp.eq.s32.totalorder %s39, 3
      %p465 = scmp.ne.s32.totalorder %s460, %s462
      %p466 = scmp.eq.s32.totalorder %s39, 0
      %p467 = por %p465, %p466
      %p468 = scmp.ne.s32.totalorder %s460, %s462
      %p469 = scmp.eq.s32.totalorder %s44, 3
      %p470 = por %p468, %p469
      %p471 = scmp.ne.s32.totalorder %s462, %s463
      %p472 = scmp.eq.s32.totalorder %s44, 0
      %p473 = por %p471, %p472
      %p474 = scmp.ne.s32.totalorder %s462, %s463
      %p475 = scmp.eq.s32.totalorder %s45, 3
      %p476 = por %p474, %p475
      %p478 = scmp.ne.s32.totalorder %s463, %s477
      %p479 = scmp.eq.s32.totalorder %s45, 0
      %p480 = por %p478, %p479
      %s481 = ssub.s32 %s46, %s58
      %p482 = scmp.eq.s32.totalorder %s481, 0
      %s484 = sadd.s32 %s483, 1
      %s485 = scalar_select %p482, %s483, %s484
      %p488 = pneg %p482
      %p489 = scmp.eq.s32.totalorder %s39, 3
      %p490 = por %p488, %p489
      %p491 = scmp.ne.s32.totalorder %s483, %s486
      %p492 = scmp.eq.s32.totalorder %s39, 0
      %p493 = por %p491, %p492
      %p494 = scmp.ne.s32.totalorder %s483, %s486
      %p495 = scmp.eq.s32.totalorder %s44, 3
      %p496 = por %p494, %p495
      %p497 = scmp.ne.s32.totalorder %s486, %s487
      %p498 = scmp.eq.s32.totalorder %s44, 0
      %p499 = por %p497, %p498
      %p500 = scmp.ne.s32.totalorder %s486, %s487
      %p501 = scmp.eq.s32.totalorder %s45, 3
      %p502 = por %p500, %p501
      %p504 = scmp.ne.s32.totalorder %s487, %s503
      %p505 = scmp.eq.s32.totalorder %s45, 0
      %p506 = por %p504, %p505
      %p507 = scmp.le.s32.totalorder 1, %s39
      %p508 = scmp.lt.s32.totalorder %s39, 5
      %p509 = pnand %p507, %p508
      %p510 = pneg %p509
      // Predicated region
      $region9: #{bert_encoder_forward.1} parent=5 // pred_check
        _
      $region10: #{bert_encoder_forward.1} parent=5 // pred_check_branch
        %512 = sbr.rel (%p509) target = $region12
      $region11: #{bert_encoder_forward.1} parent=5 // pred_region
        %s513 = ssub.s32 %s39, 1
        // Predicated region
        $region13: #{bert_encoder_forward.1} parent=11 // pred_check
          %p514 = pneg %p98
        $region14: #{bert_encoder_forward.1} parent=11 // pred_check_branch
          %516 = sbr.rel (%p514) target = $region16
        $region15: #{bert_encoder_forward.1} parent=11 // pred_region
          _
        $region16: #{bert_encoder_forward.1} parent=11 // pred_fallthru
          _
        // Predicated region
        $region17: #{bert_encoder_forward.1} parent=11 // pred_check
          %p517 = pneg %p119
        $region18: #{bert_encoder_forward.1} parent=11 // pred_check_branch
          %519 = sbr.rel (%p517) target = $region20
        $region19: #{bert_encoder_forward.1} parent=11 // pred_region
          _
        $region20: #{bert_encoder_forward.1} parent=11 // pred_fallthru
          _
        // Predicated region
        $region21: #{bert_encoder_forward.1} parent=11 // pred_check
          %p520 = pneg %p452
        $region22: #{bert_encoder_forward.1} parent=11 // pred_check_branch
          %522 = sbr.rel (%p520) target = $region24
        $region23: #{bert_encoder_forward.1} parent=11 // pred_region
          %524 = vsyncadd [#allocation11], 0
          %s525 = sshll.u32 %s16, 4
          %s526 = int_to_ptr.hbm [resolvable:$true] %s525
          %s527 = sshll.u32 [#allocation10], 4
          %s528 = int_to_ptr.vmem [resolvable:$true] %s527
          %533 = dma.hbm_to_vmem [thread:$0]  %s526, 2048, %s528, [#allocation11], 128, 128, 8
        $region24: #{bert_encoder_forward.1} parent=11 // pred_fallthru
          _
        // Predicated region
        $region25: #{bert_encoder_forward.1} parent=11 // pred_check
          %p534 = pneg %p473
        $region26: #{bert_encoder_forward.1} parent=11 // pred_check_branch
          %536 = sbr.rel (%p534) target = $region28
        $region27: #{bert_encoder_forward.1} parent=11 // pred_region
          _
        $region28: #{bert_encoder_forward.1} parent=11 // pred_fallthru
          _
      $region12: #{bert_encoder_forward.1} parent=5 // pred_fallthru
        _
      %p537 = scmp.lt.s32.totalorder %s39, 4
      // Predicated region
      $region29: #{bert_encoder_forward.1} parent=5 // pred_check
        %p538 = pneg %p537
      $region30: #{bert_encoder_forward.1} parent=5 // pred_check_branch
        %540 = sbr.rel (%p538) target = $region32
      $region31: #{bert_encoder_forward.1} parent=5 // pred_region
        // Predicated region
        $region33: #{bert_encoder_forward.1} parent=31 // pred_check
          %p541 = pneg %p71
        $region34: #{bert_encoder_forward.1} parent=31 // pred_check_branch
          %543 = sbr.rel (%p541) target = $region36
        $region35: #{bert_encoder_forward.1} parent=31 // pred_region
          %p544 = scmp.lt.s32.totalorder %s46, 1
          %s545 = scalar_select %p544, %s46, 1
          %s546 = smul.addr %s545, 8
          %s547 = scalar_lea.vmem %s1, %s546
        $region36: #{bert_encoder_forward.1} parent=31 // pred_fallthru
          _
        // Predicated region
        $region37: #{bert_encoder_forward.1} parent=31 // pred_check
          %p548 = pneg %p139
        $region38: #{bert_encoder_forward.1} parent=31 // pred_check_branch
          %550 = sbr.rel (%p548) target = $region40
        $region39: #{bert_encoder_forward.1} parent=31 // pred_region
          %s551 = sand.u32 %s129, 1
          %s552 = scalar_lea.sflag [#allocation6], %s551
          %s553 = sand.u32 %s129, 1
          %s554 = smul.addr %s553, 192
          %s555 = scalar_lea.vmem [#allocation5], %s554
          %557 = vsyncadd %s552, 0
          %s558 = smul.addr %s47, 48
          %s559 = smul.addr %s558, 4
          %s560 = scalar_lea.hbm %s4, %s559
          %s561 = sshll.u32 %s560, 4
          %s562 = int_to_ptr.hbm [resolvable:$true] %s561
          %s563 = sshll.u32 %s555, 4
          %s564 = int_to_ptr.vmem [resolvable:$true] %s563
          %569 = dma.hbm_to_vmem [thread:$0]  %s562, 3072, %s564, %s552, 192, 192, 12
        $region40: #{bert_encoder_forward.1} parent=31 // pred_fallthru
          _
        // Predicated region
        $region41: #{bert_encoder_forward.1} parent=31 // pred_check
          %p570 = pneg %p165
        $region42: #{bert_encoder_forward.1} parent=31 // pred_check_branch
          %572 = sbr.rel (%p570) target = $region44
        $region43: #{bert_encoder_forward.1} parent=31 // pred_region
          %p573 = scmp.lt.s32.totalorder %s47, 1
          %s574 = scalar_select %p573, %s47, 1
          %s575 = smul.addr %s574, 3
          %s576 = scalar_lea.vmem %s5, %s575
        $region44: #{bert_encoder_forward.1} parent=31 // pred_fallthru
          _
        // Predicated region
        $region45: #{bert_encoder_forward.1} parent=31 // pred_check
          %p577 = pneg %p191
        $region46: #{bert_encoder_forward.1} parent=31 // pred_check_branch
          %579 = sbr.rel (%p577) target = $region48
        $region47: #{bert_encoder_forward.1} parent=31 // pred_region
          %p580 = scmp.lt.s32.totalorder %s47, 1
          %s581 = scalar_select %p580, %s47, 1
          %s582 = smul.addr %s581, 16
          %s583 = smul.addr %s582, 4
          %s584 = scalar_lea.vmem %s6, %s583
        $region48: #{bert_encoder_forward.1} parent=31 // pred_fallthru
          _
        // Predicated region
        $region49: #{bert_encoder_forward.1} parent=31 // pred_check
          %p585 = pneg %p217
        $region50: #{bert_encoder_forward.1} parent=31 // pred_check_branch
          %587 = sbr.rel (%p585) target = $region52
        $region51: #{bert_encoder_forward.1} parent=31 // pred_region
          %p588 = scmp.lt.s32.totalorder %s47, 1
          %s589 = scalar_select %p588, %s47, 1
          %s590 = scalar_lea.vmem %s7, %s589
        $region52: #{bert_encoder_forward.1} parent=31 // pred_fallthru
          _
        // Predicated region
        $region53: #{bert_encoder_forward.1} parent=31 // pred_check
          %p591 = pneg %p243
        $region54: #{bert_encoder_forward.1} parent=31 // pred_check_branch
          %593 = sbr.rel (%p591) target = $region56
        $region55: #{bert_encoder_forward.1} parent=31 // pred_region
          %p594 = scmp.lt.s32.totalorder %s47, 1
          %s595 = scalar_select %p594, %s47, 1
          %s596 = scalar_lea.vmem %s8, %s595
        $region56: #{bert_encoder_forward.1} parent=31 // pred_fallthru
          _
        // Predicated region
        $region57: #{bert_encoder_forward.1} parent=31 // pred_check
          %p597 = pneg %p269
        $region58: #{bert_encoder_forward.1} parent=31 // pred_check_branch
          %599 = sbr.rel (%p597) target = $region60
        $region59: #{bert_encoder_forward.1} parent=31 // pred_region
          %p600 = scmp.lt.s32.totalorder %s47, 1
          %s601 = scalar_select %p600, %s47, 1
          %s602 = scalar_lea.vmem %s9, %s601
        $region60: #{bert_encoder_forward.1} parent=31 // pred_fallthru
          _
        // Predicated region
        $region61: #{bert_encoder_forward.1} parent=31 // pred_check
          %p603 = pneg %p295
        $region62: #{bert_encoder_forward.1} parent=31 // pred_check_branch
          %605 = sbr.rel (%p603) target = $region64
        $region63: #{bert_encoder_forward.1} parent=31 // pred_region
          %s606 = sand.u32 %s39, 1
          %s607 = scalar_lea.sflag [#allocation8], %s606
          %s608 = sand.u32 %s285, 1
          %s609 = smul.addr %s608, 128
          %s610 = scalar_lea.vmem [#allocation7], %s609
          %612 = vsyncadd %s607, 0
          %s613 = smul.addr %s47, 32
          %s614 = smul.addr %s613, 4
          %s615 = scalar_lea.hbm %s10, %s614
          %s616 = sshll.u32 %s615, 4
          %s617 = int_to_ptr.hbm [resolvable:$true] %s616
          %s618 = sshll.u32 %s610, 4
          %s619 = int_to_ptr.vmem [resolvable:$true] %s618
          %624 = dma.hbm_to_vmem [thread:$0]  %s617, 2048, %s619, %s607, 128, 128, 8
        $region64: #{bert_encoder_forward.1} parent=31 // pred_fallthru
          _
        // Predicated region
        $region65: #{bert_encoder_forward.1} parent=31 // pred_check
          %p625 = pneg %p321
        $region66: #{bert_encoder_forward.1} parent=31 // pred_check_branch
          %627 = sbr.rel (%p625) target = $region68
        $region67: #{bert_encoder_forward.1} parent=31 // pred_region
          %p628 = scmp.lt.s32.totalorder %s47, 1
          %s629 = scalar_select %p628, %s47, 1
          %s630 = smul.addr %s629, 2
          %s631 = scalar_lea.vmem %s11, %s630
        $region68: #{bert_encoder_forward.1} parent=31 // pred_fallthru
          _
        // Predicated region
        $region69: #{bert_encoder_forward.1} parent=31 // pred_check
          %p632 = pneg %p347
        $region70: #{bert_encoder_forward.1} parent=31 // pred_check_branch
          %634 = sbr.rel (%p632) target = $region72
        $region71: #{bert_encoder_forward.1} parent=31 // pred_region
          %s635 = sand.u32 %s39, 1
          %s636 = scalar_lea.sflag [#allocation8], %s635
          %s637 = sand.u32 %s337, 1
          %s638 = smul.addr %s637, 128
          %s639 = scalar_lea.vmem [#allocation9], %s638
          %641 = vsyncadd %s636, 0
          %s642 = smul.addr %s47, 32
          %s643 = smul.addr %s642, 4
          %s644 = scalar_lea.hbm %s12, %s643
          %s645 = sshll.u32 %s644, 4
          %s646 = int_to_ptr.hbm [resolvable:$true] %s645
          %s647 = sshll.u32 %s639, 4
          %s648 = int_to_ptr.vmem [resolvable:$true] %s647
          %653 = dma.hbm_to_vmem [thread:$0]  %s646, 2048, %s648, %s636, 64, 64, 4
        $region72: #{bert_encoder_forward.1} parent=31 // pred_fallthru
          _
        // Predicated region
        $region73: #{bert_encoder_forward.1} parent=31 // pred_check
          %p654 = pneg %p373
        $region74: #{bert_encoder_forward.1} parent=31 // pred_check_branch
          %656 = sbr.rel (%p654) target = $region76
        $region75: #{bert_encoder_forward.1} parent=31 // pred_region
          %p657 = scmp.lt.s32.totalorder %s47, 1
          %s658 = scalar_select %p657, %s47, 1
          %s659 = scalar_lea.vmem %s13, %s658
        $region76: #{bert_encoder_forward.1} parent=31 // pred_fallthru
          _
        // Predicated region
        $region77: #{bert_encoder_forward.1} parent=31 // pred_check
          %p660 = pneg %p399
        $region78: #{bert_encoder_forward.1} parent=31 // pred_check_branch
          %662 = sbr.rel (%p660) target = $region80
        $region79: #{bert_encoder_forward.1} parent=31 // pred_region
          %p663 = scmp.lt.s32.totalorder %s47, 1
          %s664 = scalar_select %p663, %s47, 1
          %s665 = scalar_lea.vmem %s14, %s664
        $region80: #{bert_encoder_forward.1} parent=31 // pred_fallthru
          _
        // Predicated region
        $region81: #{bert_encoder_forward.1} parent=31 // pred_check
          %p666 = pneg %p425
        $region82: #{bert_encoder_forward.1} parent=31 // pred_check_branch
          %668 = sbr.rel (%p666) target = $region84
        $region83: #{bert_encoder_forward.1} parent=31 // pred_region
          %p669 = scmp.lt.s32.totalorder %s47, 1
          %s670 = scalar_select %p669, %s47, 1
          %s671 = scalar_lea.vmem %s15, %s670
        $region84: #{bert_encoder_forward.1} parent=31 // pred_fallthru
          _
      $region32: #{bert_encoder_forward.1} parent=5 // pred_fallthru
        _
      %p672 = scmp.le.s32.totalorder 1, %s39
      %p673 = scmp.lt.s32.totalorder %s39, 5
      %p674 = pnand %p672, %p673
      %p675 = pneg %p674
      // Predicated region
      $region85: #{bert_encoder_forward.1} parent=5 // pred_check
        _
      $region86: #{bert_encoder_forward.1} parent=5 // pred_check_branch
        %677 = sbr.rel (%p674) target = $region88
      $region87: #{bert_encoder_forward.1} parent=5 // pred_region
        %s678 = ssub.s32 %s39, 1
        %s679 = sand.u32 %s132, 1
        %s680 = scalar_lea.sflag [#allocation6], %s679
        %s681 = sand.u32 %s132, 1
        %s682 = smul.addr %s681, 192
        %s683 = scalar_lea.vmem [#allocation5], %s682
        // Predicated region
        $region89: #{bert_encoder_forward.1} parent=87 // pred_check
          %p684 = pneg %p145
        $region90: #{bert_encoder_forward.1} parent=87 // pred_check_branch
          %686 = sbr.rel (%p684) target = $region92
        $region91: #{bert_encoder_forward.1} parent=87 // pred_region
          %688 = dma.done %s680, 3072
        $region92: #{bert_encoder_forward.1} parent=87 // pred_fallthru
          _
        %s689 = sand.u32 %s44, 1
        %s690 = scalar_lea.sflag [#allocation8], %s689
        %s691 = sand.u32 %s288, 1
        %s692 = smul.addr %s691, 128
        %s693 = scalar_lea.vmem [#allocation7], %s692
        // Predicated region
        $region93: #{bert_encoder_forward.1} parent=87 // pred_check
          %p694 = pneg %p301
        $region94: #{bert_encoder_forward.1} parent=87 // pred_check_branch
          %696 = sbr.rel (%p694) target = $region96
        $region95: #{bert_encoder_forward.1} parent=87 // pred_region
          %698 = dma.done %s690, 2048
        $region96: #{bert_encoder_forward.1} parent=87 // pred_fallthru
          _
        %s699 = sand.u32 %s44, 1
        %s700 = scalar_lea.sflag [#allocation8], %s699
        %s701 = sand.u32 %s340, 1
        %s702 = smul.addr %s701, 128
        %s703 = scalar_lea.vmem [#allocation9], %s702
        // Predicated region
        $region97: #{bert_encoder_forward.1} parent=87 // pred_check
          %p704 = pneg %p353
        $region98: #{bert_encoder_forward.1} parent=87 // pred_check_branch
          %706 = sbr.rel (%p704) target = $region100
        $region99: #{bert_encoder_forward.1} parent=87 // pred_region
          %708 = dma.done %s700, 2048
        $region100: #{bert_encoder_forward.1} parent=87 // pred_fallthru
          _
        // Predicated region
        $region101: #{bert_encoder_forward.1} parent=87 // pred_check
          %p709 = pneg %p452
        $region102: #{bert_encoder_forward.1} parent=87 // pred_check_branch
          %711 = sbr.rel (%p709) target = $region104
        $region103: #{bert_encoder_forward.1} parent=87 // pred_region
          %713 = dma.done [#allocation11], 2048
        $region104: #{bert_encoder_forward.1} parent=87 // pred_fallthru
          _
        %p714 = scmp.lt.s32.totalorder %s48, 1
        %s715 = scalar_select %p714, %s48, 1
        %s716 = smul.addr %s715, 8
        %s717 = scalar_lea.vmem %s1, %s716
        %p718 = pneg %p77
        %p719 = pneg %p74
        %p720 = pneg %p98
        %p721 = pneg %p95
        %p722 = pneg %p119
        %p723 = pneg %p116
        %s724 = sand.u32 %s132, 1
        %s725 = scalar_lea.sflag [#allocation6], %s724
        %s726 = sand.u32 %s132, 1
        %s727 = smul.addr %s726, 192
        %s728 = scalar_lea.vmem [#allocation5], %s727
        %p729 = pneg %p145
        %p730 = pneg %p142
        %p731 = scmp.lt.s32.totalorder %s49, 1
        %s732 = scalar_select %p731, %s49, 1
        %s733 = smul.addr %s732, 3
        %s734 = scalar_lea.vmem %s5, %s733
        %p735 = pneg %p171
        %p736 = pneg %p168
        %p737 = scmp.lt.s32.totalorder %s49, 1
        %s738 = scalar_select %p737, %s49, 1
        %s739 = smul.addr %s738, 16
        %s740 = smul.addr %s739, 4
        %s741 = scalar_lea.vmem %s6, %s740
        %p742 = pneg %p197
        %p743 = pneg %p194
        %p744 = scmp.lt.s32.totalorder %s49, 1
        %s745 = scalar_select %p744, %s49, 1
        %s746 = scalar_lea.vmem %s7, %s745
        %p747 = pneg %p223
        %p748 = pneg %p220
        %p749 = scmp.lt.s32.totalorder %s49, 1
        %s750 = scalar_select %p749, %s49, 1
        %s751 = scalar_lea.vmem %s8, %s750
        %p752 = pneg %p249
        %p753 = pneg %p246
        %p754 = scmp.lt.s32.totalorder %s49, 1
        %s755 = scalar_select %p754, %s49, 1
        %s756 = scalar_lea.vmem %s9, %s755
        %p757 = pneg %p275
        %p758 = pneg %p272
        %s759 = sand.u32 %s44, 1
        %s760 = scalar_lea.sflag [#allocation8], %s759
        %s761 = sand.u32 %s288, 1
        %s762 = smul.addr %s761, 128
        %s763 = scalar_lea.vmem [#allocation7], %s762
        %p764 = pneg %p301
        %p765 = pneg %p298
        %p766 = scmp.lt.s32.totalorder %s49, 1
        %s767 = scalar_select %p766, %s49, 1
        %s768 = smul.addr %s767, 2
        %s769 = scalar_lea.vmem %s11, %s768
        %p770 = pneg %p327
        %p771 = pneg %p324
        %s772 = sand.u32 %s44, 1
        %s773 = scalar_lea.sflag [#allocation8], %s772
        %s774 = sand.u32 %s340, 1
        %s775 = smul.addr %s774, 128
        %s776 = scalar_lea.vmem [#allocation9], %s775
        %p777 = pneg %p353
        %p778 = pneg %p350
        %p779 = scmp.lt.s32.totalorder %s49, 1
        %s780 = scalar_select %p779, %s49, 1
        %s781 = scalar_lea.vmem %s13, %s780
        %p782 = pneg %p379
        %p783 = pneg %p376
        %p784 = scmp.lt.s32.totalorder %s49, 1
        %s785 = scalar_select %p784, %s49, 1
        %s786 = scalar_lea.vmem %s14, %s785
        %p787 = pneg %p405
        %p788 = pneg %p402
        %p789 = scmp.lt.s32.totalorder %s49, 1
        %s790 = scalar_select %p789, %s49, 1
        %s791 = scalar_lea.vmem %s15, %s790
        %p792 = pneg %p431
        %p793 = pneg %p428
        %p794 = pneg %p452
        %p795 = pneg %p449
        %p796 = pneg %p473
        %p797 = pneg %p470
        %p798 = pneg %p499
        %p799 = pneg %p496
        %p800 = scmp.lt.s32.totalorder %s48, 1
        %s801 = scalar_select %p800, %s48, 1
        %s802 = smul.addr %s801, 8
        %s803 = scalar_lea.vmem %s18, %s802
        %p804 = scmp.lt.s32.totalorder %s48, 1
        %s805 = scalar_select %p804, %s48, 1
        %s806 = smul.addr %s805, 8
        %s807 = scalar_lea.vmem %s1, %s806
        %p808 = scmp.lt.s32.totalorder %s49, 1
        %s809 = scalar_select %p808, %s49, 1
        %s810 = smul.addr %s809, 3
        %s811 = scalar_lea.vmem %s5, %s810
        %p812 = scmp.lt.s32.totalorder %s49, 1
        %s813 = scalar_select %p812, %s49, 1
        %s814 = smul.addr %s813, 16
        %s815 = smul.addr %s814, 4
        %s816 = scalar_lea.vmem %s6, %s815
        %p817 = scmp.lt.s32.totalorder %s49, 1
        %s818 = scalar_select %p817, %s49, 1
        %s819 = scalar_lea.vmem %s7, %s818
        %p820 = scmp.lt.s32.totalorder %s49, 1
        %s821 = scalar_select %p820, %s49, 1
        %s822 = scalar_lea.vmem %s8, %s821
        %p823 = scmp.lt.s32.totalorder %s49, 1
        %s824 = scalar_select %p823, %s49, 1
        %s825 = scalar_lea.vmem %s9, %s824
        %p826 = scmp.lt.s32.totalorder %s49, 1
        %s827 = scalar_select %p826, %s49, 1
        %s828 = smul.addr %s827, 2
        %s829 = scalar_lea.vmem %s11, %s828
        %p830 = scmp.lt.s32.totalorder %s49, 1
        %s831 = scalar_select %p830, %s49, 1
        %s832 = scalar_lea.vmem %s13, %s831
        %p833 = scmp.lt.s32.totalorder %s49, 1
        %s834 = scalar_select %p833, %s49, 1
        %s835 = scalar_lea.vmem %s14, %s834
        %p836 = scmp.lt.s32.totalorder %s49, 1
        %s837 = scalar_select %p836, %s49, 1
        %s838 = scalar_lea.vmem %s15, %s837
        %p839 = scmp.lt.s32.totalorder %s48, 1
        %s840 = scalar_select %p839, %s48, 1
        %s841 = smul.addr %s840, 8
        %s842 = scalar_lea.vmem %s18, %s841
        %p844 = scmp.eq.s32.totalorder %s49, 0
        // Predicated region
        $region105: #{bert_encoder_forward.1} parent=87 // pred_check
          %p845 = pneg %p844
        $region106: #{bert_encoder_forward.1} parent=87 // pred_check_branch
          %847 = sbr.rel (%p845) target = $region108
        $region107: #{bert_encoder_forward.1} parent=87 // pred_region
          %v848 = vld [vmem:[%s807] sm:$0xff]
          %v849 = vld [vmem:[%s2] sm:$0x1]
          %v850 = vld [vmem:[%s3] sm:$0x1]
          %851 = vadd.xlane.f32.xlu0 %v848
          %v852 = vpop.xlane.xlu0 %851
          %v853 = vrcp.pop 128.0
          %v854 = vmul.f32 128.0, %v853
          %v855 = vsub.f32 1.0, %v854
          %v856 = vmul.f32 %v853, %v855
          %v857 = vadd.f32 %v853, %v856
          %vm858 = vweird.f32 %v853
          %v859 = vsel %vm858, %v853, %v857
          %v860 = vmul.f32 %v852, %v859
          %v861 = vmul.f32 %v848, %v848
          %862 = vadd.xlane.f32.xlu0 %v861
          %v863 = vpop.xlane.xlu0 %862
          %v864 = vmul.f32 %v863, %v859
          %v865 = vmul.f32 %v860, %v860
          %v866 = vsub.f32 %v864, %v865
          %v867 = vmax.f32 %v866, 0.0
          %v868 = vsub.f32 %v848, %v860
          %v869 = vadd.f32 %v867, 1e-12
          %v870 = vrsqrt.pop %v869
          %v871 = vmul.f32 %v870, %v869
          %v872 = vmul.f32 %v871, %v870
          %v873 = vmul.f32 0.5, %v872
          %v874 = vsub.f32 1.5, %v873
          %v875 = vmul.f32 %v870, %v874
          %vm876 = vweird.f32 %v869
          %vm877 = vweird.f32 %v870
          %vm878 = vmor %vm876, %vm877
          %v879 = vsel %vm878, %v870, %v875
          %v880 = vmul.f32 %v868, %v879
          %v882 = vperm.slane %v849, 0
          %v884 = vmul.f32 %v880, %v882
          %v886 = vperm.slane %v850, 0
          %v888 = vadd.f32 %v884, %v886
          %889 = vst [vmem:[#allocation2] sm:$0xff] %v888
        $region108: #{bert_encoder_forward.1} parent=87 // pred_fallthru
          _
        %v890 = vld [vmem:[#allocation2] sm:$0xff]
        %s891 = sld [smem:[#allocation4 + %s48]]
        %v892 = vlaneseq
        %v893 = vand.u32 %v892, 127
        %v894 = vstv %s891
        %vm895 = vcmp.lt.s32.totalorder %v893, %v894
        %v896 = vsel %vm895, 0.0, -10000.0
        %v897 = vpack.c.bf16 %v890, %v890
        %v898 = vld [vmem:[%s683] sm:$0xff]
        %v899 = vld [vmem:[%s683 + $0x8] sm:$0xf]
        %v900 = vld [vmem:[%s683 + $0xc] sm:$0xff]
        %v901 = vld [vmem:[%s683 + $0x14] sm:$0xf]
        %v902 = vld [vmem:[%s683 + $0x18] sm:$0xff]
        %v903 = vld [vmem:[%s683 + $0x20] sm:$0xf]
        %v904 = vld [vmem:[%s683 + $0x24] sm:$0xff]
        %v905 = vld [vmem:[%s683 + $0x2c] sm:$0xf]
        %v906 = vld [vmem:[%s683 + $0x30] sm:$0xff]
        %v907 = vld [vmem:[%s683 + $0x38] sm:$0xf]
        %v908 = vld [vmem:[%s683 + $0x3c] sm:$0xff]
        %v909 = vld [vmem:[%s683 + $0x44] sm:$0xf]
        %v910 = vld [vmem:[%s683 + $0x48] sm:$0xff]
        %v911 = vld [vmem:[%s683 + $0x50] sm:$0xf]
        %v912 = vld [vmem:[%s683 + $0x54] sm:$0xff]
        %v913 = vld [vmem:[%s683 + $0x5c] sm:$0xf]
        %v914 = vld [vmem:[%s683 + $0x60] sm:$0xff]
        %v915 = vld [vmem:[%s683 + $0x68] sm:$0xf]
        %v916 = vld [vmem:[%s683 + $0x6c] sm:$0xff]
        %v917 = vld [vmem:[%s683 + $0x74] sm:$0xf]
        %v918 = vld [vmem:[%s683 + $0x78] sm:$0xff]
        %v919 = vld [vmem:[%s683 + $0x80] sm:$0xf]
        %v920 = vld [vmem:[%s683 + $0x84] sm:$0xff]
        %v921 = vld [vmem:[%s683 + $0x8c] sm:$0xf]
        %v922 = vld [vmem:[%s683 + $0x90] sm:$0xff]
        %v923 = vld [vmem:[%s683 + $0x98] sm:$0xf]
        %v924 = vld [vmem:[%s683 + $0x9c] sm:$0xff]
        %v925 = vld [vmem:[%s683 + $0xa4] sm:$0xf]
        %v926 = vld [vmem:[%s683 + $0xa8] sm:$0xff]
        %v927 = vld [vmem:[%s683 + $0xb0] sm:$0xf]
        %v928 = vld [vmem:[%s683 + $0xb4] sm:$0xff]
        %v929 = vld [vmem:[%s683 + $0xbc] sm:$0xf]
        %v930 = vld [vmem:[%s811] sm:$0x7]
        %v932 = vperm.slane %v930, 0
        %v933 = vperm.slane %v930, 1
        %v934 = vperm.slane %v930, 2
        %v970 = vunpack.c.l.b16 %v898
        %v971 = vunpack.c.h.b16 %v898
        %v972 = vunpack.c.l.b16 %v899
        %v973 = vunpack.c.l.b16 %v900
        %v974 = vunpack.c.h.b16 %v900
        %v975 = vunpack.c.l.b16 %v901
        %v976 = vunpack.c.l.b16 %v902
        %v977 = vunpack.c.h.b16 %v902
        %v978 = vunpack.c.l.b16 %v903
        %v979 = vunpack.c.l.b16 %v904
        %v980 = vunpack.c.h.b16 %v904
        %v981 = vunpack.c.l.b16 %v905
        %v982 = vunpack.c.l.b16 %v906
        %v983 = vunpack.c.h.b16 %v906
        %v984 = vunpack.c.l.b16 %v907
        %v985 = vunpack.c.l.b16 %v908
        %v986 = vunpack.c.h.b16 %v908
        %v987 = vunpack.c.l.b16 %v909
        %v988 = vunpack.c.l.b16 %v910
        %v989 = vunpack.c.h.b16 %v910
        %v990 = vunpack.c.l.b16 %v911
        %v991 = vunpack.c.l.b16 %v912
        %v992 = vunpack.c.h.b16 %v912
        %v993 = vunpack.c.l.b16 %v913
        %v994 = vunpack.c.l.b16 %v914
        %v995 = vunpack.c.h.b16 %v914
        %v996 = vunpack.c.l.b16 %v915
        %v997 = vunpack.c.l.b16 %v916
        %v998 = vunpack.c.h.b16 %v916
        %v999 = vunpack.c.l.b16 %v917
        %v1000 = vunpack.c.l.b16 %v918
        %v1001 = vunpack.c.h.b16 %v918
        %v1002 = vunpack.c.l.b16 %v919
        %v1003 = vunpack.c.l.b16 %v920
        %v1004 = vunpack.c.h.b16 %v920
        %v1005 = vunpack.c.l.b16 %v921
        %v1006 = vunpack.c.l.b16 %v922
        %v1007 = vunpack.c.h.b16 %v922
        %v1008 = vunpack.c.l.b16 %v923
        %v1009 = vunpack.c.l.b16 %v924
        %v1010 = vunpack.c.h.b16 %v924
        %v1011 = vunpack.c.l.b16 %v925
        %v1012 = vunpack.c.l.b16 %v926
        %v1013 = vunpack.c.h.b16 %v926
        %v1014 = vunpack.c.l.b16 %v927
        %v1015 = vunpack.c.l.b16 %v928
        %v1016 = vunpack.c.h.b16 %v928
        %v1017 = vunpack.c.l.b16 %v929
        %v1018 = vpack.c.b16 %v973, %v970
        %v1019 = vpack.c.b16 %v974, %v971
        %v1020 = vpack.c.b16 %v975, %v972
        %v1021 = vpack.c.b16 %v979, %v976
        %v1022 = vpack.c.b16 %v980, %v977
        %v1023 = vpack.c.b16 %v981, %v978
        %v1024 = vpack.c.b16 %v985, %v982
        %v1025 = vpack.c.b16 %v986, %v983
        %v1026 = vpack.c.b16 %v987, %v984
        %v1027 = vpack.c.b16 %v991, %v988
        %v1028 = vpack.c.b16 %v992, %v989
        %v1029 = vpack.c.b16 %v993, %v990
        %v1030 = vpack.c.b16 %v997, %v994
        %v1031 = vpack.c.b16 %v998, %v995
        %v1032 = vpack.c.b16 %v999, %v996
        %v1033 = vpack.c.b16 %v1003, %v1000
        %v1034 = vpack.c.b16 %v1004, %v1001
        %v1035 = vpack.c.b16 %v1005, %v1002
        %v1036 = vpack.c.b16 %v1009, %v1006
        %v1037 = vpack.c.b16 %v1010, %v1007
        %v1038 = vpack.c.b16 %v1011, %v1008
        %v1039 = vpack.c.b16 %v1015, %v1012
        %v1040 = vpack.c.b16 %v1016, %v1013
        %v1041 = vpack.c.b16 %v1017, %v1014
        %1066 = vmatpush.bf16.msra.mxu0 %v1039
        %1067 = vmatpush.bf16.msra.mxu0 %v1036
        %1068 = vmatpush.bf16.msra.mxu0 %v1033
        %1069 = vmatpush.bf16.msra.mxu0 %v1030
        %1070 = vmatpush.bf16.msra.mxu0 %v1027
        %1071 = vmatpush.bf16.msra.mxu0 %v1024
        %1072 = vmatpush.bf16.msra.mxu0 %v1021
        %1073 = vmatpush.bf16.msra.mxu0 %v1018
        %1074 = vmatmul.bf16.gmra.mxu0 %v897
        %v1075 = vpop.f32.mrf.mxu0
        %v1076 = vadd.f32 %v932, %v1075
        %v1077 = vpop.f32.mrf.mxu0
        %1078 = vdwg.mxu0
        %1079 = vmatpush.bf16.msra.mxu0 %v1040
        %1080 = vmatpush.bf16.msra.mxu0 %v1037
        %1081 = vmatpush.bf16.msra.mxu0 %v1034
        %1082 = vmatpush.bf16.msra.mxu0 %v1031
        %1083 = vmatpush.bf16.msra.mxu0 %v1028
        %1084 = vmatpush.bf16.msra.mxu0 %v1025
        %1085 = vmatpush.bf16.msra.mxu0 %v1022
        %1086 = vmatpush.bf16.msra.mxu0 %v1019
        %1087 = vmatmul.bf16.gmra.mxu0 %v897
        %v1088 = vpop.f32.mrf.mxu0
        %v1089 = vadd.f32 %v933, %v1088
        %v1090 = vpop.f32.mrf.mxu0
        %1091 = vdwg.mxu0
        %1092 = vmatpush.bf16.msra.mxu0 %v1041
        %1093 = vmatpush.bf16.msra.mxu0 %v1038
        %1094 = vmatpush.bf16.msra.mxu0 %v1035
        %1095 = vmatpush.bf16.msra.mxu0 %v1032
        %1096 = vmatpush.bf16.msra.mxu0 %v1029
        %1097 = vmatpush.bf16.msra.mxu0 %v1026
        %1098 = vmatpush.bf16.msra.mxu0 %v1023
        %1099 = vmatpush.bf16.msra.mxu0 %v1020
        %1100 = vmatmul.bf16.gmra.mxu0 %v897
        %v1101 = vpop.f32.mrf.mxu0
        %v1102 = vadd.f32 %v934, %v1101
        %v1103 = vpop.f32.mrf.mxu0
        %1104 = vdwg.mxu0
        %1106 = vrot.lane.b32.xlu0 %v1076, 96
        %v1107 = vpop.permute.xlu0 %1106
        %1108 = vrot.lane.b32.xlu0 %v1076, 64
        %v1109 = vpop.permute.xlu0 %1108
        %1110 = vrot.lane.b32.xlu0 %v1076, 32
        %v1111 = vpop.permute.xlu0 %1110
        %1113 = vrot.lane.b32.xlu0 %v1089, 96
        %v1114 = vpop.permute.xlu0 %1113
        %1115 = vrot.lane.b32.xlu0 %v1089, 64
        %v1116 = vpop.permute.xlu0 %1115
        %1117 = vrot.lane.b32.xlu0 %v1089, 32
        %v1118 = vpop.permute.xlu0 %1117
        %1120 = vrot.lane.b32.xlu0 %v1102, 96
        %v1121 = vpop.permute.xlu0 %1120
        %1123 = vrot.lane.b32.xlu0 %v1102, 64
        %v1124 = vpop.permute.xlu0 %1123
        %1126 = vrot.lane.b32.xlu0 %v1102, 32
        %v1127 = vpop.permute.xlu0 %1126
        %vm1129 = vcmask 261120
        %v1130 = vsel %vm1129, %v1076, 0
        %v1132 = vsel %vm1129, %v1089, 0
        %1134 = vmatpush.xpose.msra.mxu0 0.0
        %1135 = vmatpush.xpose.msra.mxu0 0.0
        %1136 = vmatpush.xpose.msra.mxu0 0.0
        %1137 = vmatpush.xpose.msra.mxu0 0.0
        %1138 = vmatpush.xpose.msra.mxu0 0.0
        %1139 = vmatpush.xpose.msra.mxu0 0.0
        %1140 = vmatpush.xpose.msra.mxu0 0.0
        %1141 = vmatpush.xpose.msra.mxu0 0.0
        %1142 = vmatpush.xpose.msra.mxu0 0.0
        %1143 = vmatpush.xpose.msra.mxu0 0.0
        %1144 = vmatpush.xpose.msra.mxu0 0.0
        %1145 = vmatpush.xpose.msra.mxu0 0.0
        %1146 = vmatpush.xpose.msra.mxu0 0.0
        %1147 = vmatpush.xpose.msra.mxu0 0.0
        %1148 = vmatpush.xpose.msra.mxu0 0.0
        %1149 = vmatpush.xpose.msra.mxu0 %v1132
        %1150 = vmatmul.f32.gmra.mxu0 %v1130
        %v1151 = vpop.f32.mrf.mxu0
        %v1152 = vadd.f32 0.0, %v1151
        %1153 = vdwg.mxu0
        %v1154 = vsel %vm1129, %v1107, 0
        %v1156 = vsel %vm1129, %v1114, 0
        %1158 = vmatpush.xpose.msra.mxu0 0.0
        %1159 = vmatpush.xpose.msra.mxu0 0.0
        %1160 = vmatpush.xpose.msra.mxu0 0.0
        %1161 = vmatpush.xpose.msra.mxu0 0.0
        %1162 = vmatpush.xpose.msra.mxu0 0.0
        %1163 = vmatpush.xpose.msra.mxu0 0.0
        %1164 = vmatpush.xpose.msra.mxu0 0.0
        %1165 = vmatpush.xpose.msra.mxu0 0.0
        %1166 = vmatpush.xpose.msra.mxu0 0.0
        %1167 = vmatpush.xpose.msra.mxu0 0.0
        %1168 = vmatpush.xpose.msra.mxu0 0.0
        %1169 = vmatpush.xpose.msra.mxu0 0.0
        %1170 = vmatpush.xpose.msra.mxu0 0.0
        %1171 = vmatpush.xpose.msra.mxu0 0.0
        %1172 = vmatpush.xpose.msra.mxu0 0.0
        %1173 = vmatpush.xpose.msra.mxu0 %v1156
        %1174 = vmatmul.f32.gmra.mxu0 %v1154
        %v1175 = vpop.f32.mrf.mxu0
        %v1176 = vadd.f32 0.0, %v1175
        %1177 = vdwg.mxu0
        %v1178 = vsel %vm1129, %v1109, 0
        %v1180 = vsel %vm1129, %v1116, 0
        %1182 = vmatpush.xpose.msra.mxu0 0.0
        %1183 = vmatpush.xpose.msra.mxu0 0.0
        %1184 = vmatpush.xpose.msra.mxu0 0.0
        %1185 = vmatpush.xpose.msra.mxu0 0.0
        %1186 = vmatpush.xpose.msra.mxu0 0.0
        %1187 = vmatpush.xpose.msra.mxu0 0.0
        %1188 = vmatpush.xpose.msra.mxu0 0.0
        %1189 = vmatpush.xpose.msra.mxu0 0.0
        %1190 = vmatpush.xpose.msra.mxu0 0.0
        %1191 = vmatpush.xpose.msra.mxu0 0.0
        %1192 = vmatpush.xpose.msra.mxu0 0.0
        %1193 = vmatpush.xpose.msra.mxu0 0.0
        %1194 = vmatpush.xpose.msra.mxu0 0.0
        %1195 = vmatpush.xpose.msra.mxu0 0.0
        %1196 = vmatpush.xpose.msra.mxu0 0.0
        %1197 = vmatpush.xpose.msra.mxu0 %v1180
        %1198 = vmatmul.f32.gmra.mxu0 %v1178
        %v1199 = vpop.f32.mrf.mxu0
        %v1200 = vadd.f32 0.0, %v1199
        %1201 = vdwg.mxu0
        %v1202 = vsel %vm1129, %v1111, 0
        %v1204 = vsel %vm1129, %v1118, 0
        %1206 = vmatpush.xpose.msra.mxu0 0.0
        %1207 = vmatpush.xpose.msra.mxu0 0.0
        %1208 = vmatpush.xpose.msra.mxu0 0.0
        %1209 = vmatpush.xpose.msra.mxu0 0.0
        %1210 = vmatpush.xpose.msra.mxu0 0.0
        %1211 = vmatpush.xpose.msra.mxu0 0.0
        %1212 = vmatpush.xpose.msra.mxu0 0.0
        %1213 = vmatpush.xpose.msra.mxu0 0.0
        %1214 = vmatpush.xpose.msra.mxu0 0.0
        %1215 = vmatpush.xpose.msra.mxu0 0.0
        %1216 = vmatpush.xpose.msra.mxu0 0.0
        %1217 = vmatpush.xpose.msra.mxu0 0.0
        %1218 = vmatpush.xpose.msra.mxu0 0.0
        %1219 = vmatpush.xpose.msra.mxu0 0.0
        %1220 = vmatpush.xpose.msra.mxu0 0.0
        %1221 = vmatpush.xpose.msra.mxu0 %v1204
        %1222 = vmatmul.f32.gmra.mxu0 %v1202
        %v1223 = vpop.f32.mrf.mxu0
        %v1224 = vadd.f32 0.0, %v1223
        %1225 = vdwg.mxu0
        %v1226 = vmul.f32 %v1152, 0.17677669
        %v1227 = vmul.f32 %v1176, 0.17677669
        %v1228 = vmul.f32 %v1200, 0.17677669
        %v1229 = vmul.f32 %v1224, 0.17677669
        %v1230 = vadd.f32 %v1226, %v896
        %v1231 = vadd.f32 %v1227, %v896
        %v1232 = vadd.f32 %v1228, %v896
        %v1233 = vadd.f32 %v1229, %v896
        %vm1234 = vcmask 64512
        %v1235 = vsel %vm1234, %v1230, -inf
        %1236 = vmax.xlane.f32.xlu0 %v1235
        %v1237 = vpop.xlane.xlu0 %1236
        %v1238 = vsel %vm1234, %v1231, -inf
        %1239 = vmax.xlane.f32.xlu0 %v1238
        %v1240 = vpop.xlane.xlu0 %1239
        %v1241 = vsel %vm1234, %v1232, -inf
        %1242 = vmax.xlane.f32.xlu0 %v1241
        %v1243 = vpop.xlane.xlu0 %1242
        %v1244 = vsel %vm1234, %v1233, -inf
        %1245 = vmax.xlane.f32.xlu0 %v1244
        %v1246 = vpop.xlane.xlu0 %1245
        %v1247 = vsub.f32 %v1230, %v1237
        %v1248 = vsub.f32 %v1231, %v1240
        %v1249 = vsub.f32 %v1232, %v1243
        %v1250 = vsub.f32 %v1233, %v1246
        %v1251 = vmul.f32 %v1247, 1.442695
        %v1252 = vpow.pop %v1251
        %v1253 = vmul.f32 %v1248, 1.442695
        %v1254 = vpow.pop %v1253
        %v1255 = vmul.f32 %v1249, 1.442695
        %v1256 = vpow.pop %v1255
        %v1257 = vmul.f32 %v1250, 1.442695
        %v1258 = vpow.pop %v1257
        %v1259 = vsel %vm1234, %v1252, 0.0
        %1260 = vadd.xlane.f32.xlu0 %v1259
        %v1261 = vpop.xlane.xlu0 %1260
        %v1262 = vsel %vm1234, %v1254, 0.0
        %1263 = vadd.xlane.f32.xlu0 %v1262
        %v1264 = vpop.xlane.xlu0 %1263
        %v1265 = vsel %vm1234, %v1256, 0.0
        %1266 = vadd.xlane.f32.xlu0 %v1265
        %v1267 = vpop.xlane.xlu0 %1266
        %v1268 = vsel %vm1234, %v1258, 0.0
        %1269 = vadd.xlane.f32.xlu0 %v1268
        %v1270 = vpop.xlane.xlu0 %1269
        %v1271 = vrcp.pop %v1261
        %v1272 = vrcp.pop %v1264
        %v1273 = vrcp.pop %v1267
        %v1274 = vrcp.pop %v1270
        %v1275 = vmul.f32 %v1252, %v1271
        %v1276 = vmul.f32 %v1254, %v1272
        %v1277 = vmul.f32 %v1256, %v1273
        %v1278 = vmul.f32 %v1258, %v1274
        %v1279 = vpack.c.bf16 %v1275, %v1275
        %v1280 = vpack.c.bf16 %v1276, %v1276
        %v1281 = vpack.c.bf16 %v1277, %v1277
        %v1282 = vpack.c.bf16 %v1278, %v1278
        %v1283 = vpack.c.bf16 %v1102, %v1102
        %v1284 = vpack.c.bf16 %v1121, %v1121
        %v1285 = vpack.c.bf16 %v1124, %v1124
        %v1286 = vpack.c.bf16 %v1127, %v1127
        %v1288 = vsel %vm1234, %v1279, 0
        %vm1290 = vcmask 1043456
        %v1292 = vsel %vm1290, %v1283, 0
        %1294 = vmatpush.bf16.msra.mxu0 0
        %1295 = vmatpush.bf16.msra.mxu0 0
        %1296 = vmatpush.bf16.msra.mxu0 0
        %1297 = vmatpush.bf16.msra.mxu0 0
        %1298 = vmatpush.bf16.msra.mxu0 0
        %1299 = vmatpush.bf16.msra.mxu0 0
        %1300 = vmatpush.bf16.msra.mxu0 0
        %1301 = vmatpush.bf16.msra.mxu0 %v1292
        %1302 = vmatmul.bf16.gmra.mxu0 %v1288
        %v1303 = vpop.f32.mrf.mxu0
        %v1304 = vadd.f32 0.0, %v1303
        %v1305 = vpop.f32.mrf.mxu0
        %1306 = vdwg.mxu0
        %v1308 = vsel %vm1234, %v1280, 0
        %v1311 = vsel %vm1290, %v1284, 0
        %1313 = vmatpush.bf16.msra.mxu0 0
        %1314 = vmatpush.bf16.msra.mxu0 0
        %1315 = vmatpush.bf16.msra.mxu0 0
        %1316 = vmatpush.bf16.msra.mxu0 0
        %1317 = vmatpush.bf16.msra.mxu0 0
        %1318 = vmatpush.bf16.msra.mxu0 0
        %1319 = vmatpush.bf16.msra.mxu0 0
        %1320 = vmatpush.bf16.msra.mxu0 %v1311
        %1321 = vmatmul.bf16.gmra.mxu0 %v1308
        %v1322 = vpop.f32.mrf.mxu0
        %v1323 = vadd.f32 0.0, %v1322
        %v1324 = vpop.f32.mrf.mxu0
        %1325 = vdwg.mxu0
        %v1327 = vsel %vm1234, %v1281, 0
        %v1330 = vsel %vm1290, %v1285, 0
        %1332 = vmatpush.bf16.msra.mxu0 0
        %1333 = vmatpush.bf16.msra.mxu0 0
        %1334 = vmatpush.bf16.msra.mxu0 0
        %1335 = vmatpush.bf16.msra.mxu0 0
        %1336 = vmatpush.bf16.msra.mxu0 0
        %1337 = vmatpush.bf16.msra.mxu0 0
        %1338 = vmatpush.bf16.msra.mxu0 0
        %1339 = vmatpush.bf16.msra.mxu0 %v1330
        %1340 = vmatmul.bf16.gmra.mxu0 %v1327
        %v1341 = vpop.f32.mrf.mxu0
        %v1342 = vadd.f32 0.0, %v1341
        %v1343 = vpop.f32.mrf.mxu0
        %1344 = vdwg.mxu0
        %v1346 = vsel %vm1234, %v1282, 0
        %v1349 = vsel %vm1290, %v1286, 0
        %1351 = vmatpush.bf16.msra.mxu0 0
        %1352 = vmatpush.bf16.msra.mxu0 0
        %1353 = vmatpush.bf16.msra.mxu0 0
        %1354 = vmatpush.bf16.msra.mxu0 0
        %1355 = vmatpush.bf16.msra.mxu0 0
        %1356 = vmatpush.bf16.msra.mxu0 0
        %1357 = vmatpush.bf16.msra.mxu0 0
        %1358 = vmatpush.bf16.msra.mxu0 %v1349
        %1359 = vmatmul.bf16.gmra.mxu0 %v1346
        %v1360 = vpop.f32.mrf.mxu0
        %v1361 = vadd.f32 0.0, %v1360
        %v1362 = vpop.f32.mrf.mxu0
        %1363 = vdwg.mxu0
        %1365 = vrot.lane.b32.xlu0 %v1323, 32
        %v1366 = vpop.permute.xlu0 %1365
        %1369 = vrot.lane.b32.xlu0 %v1342, 64
        %v1370 = vpop.permute.xlu0 %1369
        %1373 = vrot.lane.b32.xlu0 %v1361, 96
        %v1374 = vpop.permute.xlu0 %1373
        %v1376 = vsel %vm1129, %v1304, %v1366
        %vm1377 = vcmask 523264
        %v1378 = vsel %vm1377, %v1376, %v1370
        %vm1379 = vcmask 785408
        %v1380 = vsel %vm1379, %v1378, %v1374
        %v1381 = vpack.c.bf16 %v1380, %v1380
        %v1382 = vld [vmem:[%s816] sm:$0xf]
        %v1383 = vld [vmem:[%s816 + $0x4] sm:$0xf]
        %v1384 = vld [vmem:[%s816 + $0x8] sm:$0xf]
        %v1385 = vld [vmem:[%s816 + $0xc] sm:$0xf]
        %v1386 = vld [vmem:[%s816 + $0x10] sm:$0xf]
        %v1387 = vld [vmem:[%s816 + $0x14] sm:$0xf]
        %v1388 = vld [vmem:[%s816 + $0x18] sm:$0xf]
        %v1389 = vld [vmem:[%s816 + $0x1c] sm:$0xf]
        %v1390 = vld [vmem:[%s816 + $0x20] sm:$0xf]
        %v1391 = vld [vmem:[%s816 + $0x24] sm:$0xf]
        %v1392 = vld [vmem:[%s816 + $0x28] sm:$0xf]
        %v1393 = vld [vmem:[%s816 + $0x2c] sm:$0xf]
        %v1394 = vld [vmem:[%s816 + $0x30] sm:$0xf]
        %v1395 = vld [vmem:[%s816 + $0x34] sm:$0xf]
        %v1396 = vld [vmem:[%s816 + $0x38] sm:$0xf]
        %v1397 = vld [vmem:[%s816 + $0x3c] sm:$0xf]
        %v1398 = vld [vmem:[%s819] sm:$0x1]
        %v1400 = vperm.slane %v1398, 0
        %v1418 = vunpack.c.l.b16 %v1382
        %v1419 = vunpack.c.l.b16 %v1383
        %v1420 = vunpack.c.l.b16 %v1384
        %v1421 = vunpack.c.l.b16 %v1385
        %v1422 = vunpack.c.l.b16 %v1386
        %v1423 = vunpack.c.l.b16 %v1387
        %v1424 = vunpack.c.l.b16 %v1388
        %v1425 = vunpack.c.l.b16 %v1389
        %v1426 = vunpack.c.l.b16 %v1390
        %v1427 = vunpack.c.l.b16 %v1391
        %v1428 = vunpack.c.l.b16 %v1392
        %v1429 = vunpack.c.l.b16 %v1393
        %v1430 = vunpack.c.l.b16 %v1394
        %v1431 = vunpack.c.l.b16 %v1395
        %v1432 = vunpack.c.l.b16 %v1396
        %v1433 = vunpack.c.l.b16 %v1397
        %v1434 = vpack.c.b16 %v1419, %v1418
        %v1435 = vpack.c.b16 %v1421, %v1420
        %v1436 = vpack.c.b16 %v1423, %v1422
        %v1437 = vpack.c.b16 %v1425, %v1424
        %v1438 = vpack.c.b16 %v1427, %v1426
        %v1439 = vpack.c.b16 %v1429, %v1428
        %v1440 = vpack.c.b16 %v1431, %v1430
        %v1441 = vpack.c.b16 %v1433, %v1432
        %1450 = vmatpush.bf16.msra.mxu0 %v1441
        %1451 = vmatpush.bf16.msra.mxu0 %v1440
        %1452 = vmatpush.bf16.msra.mxu0 %v1439
        %1453 = vmatpush.bf16.msra.mxu0 %v1438
        %1454 = vmatpush.bf16.msra.mxu0 %v1437
        %1455 = vmatpush.bf16.msra.mxu0 %v1436
        %1456 = vmatpush.bf16.msra.mxu0 %v1435
        %1457 = vmatpush.bf16.msra.mxu0 %v1434
        %1458 = vmatmul.bf16.gmra.mxu0 %v1381
        %v1459 = vpop.f32.mrf.mxu0
        %v1460 = vadd.f32 %v1400, %v1459
        %v1461 = vpop.f32.mrf.mxu0
        %1462 = vdwg.mxu0
        %v1463 = vadd.f32 %v890, %v1460
        %v1464 = vld [vmem:[%s822] sm:$0x1]
        %v1465 = vld [vmem:[%s825] sm:$0x1]
        %1466 = vadd.xlane.f32.xlu0 %v1463
        %v1467 = vpop.xlane.xlu0 %1466
        %v1468 = vrcp.pop 128.0
        %v1469 = vmul.f32 128.0, %v1468
        %v1470 = vsub.f32 1.0, %v1469
        %v1471 = vmul.f32 %v1468, %v1470
        %v1472 = vadd.f32 %v1468, %v1471
        %vm1473 = vweird.f32 %v1468
        %v1474 = vsel %vm1473, %v1468, %v1472
        %v1475 = vmul.f32 %v1467, %v1474
        %v1476 = vmul.f32 %v1463, %v1463
        %1477 = vadd.xlane.f32.xlu0 %v1476
        %v1478 = vpop.xlane.xlu0 %1477
        %v1479 = vmul.f32 %v1478, %v1474
        %v1480 = vmul.f32 %v1475, %v1475
        %v1481 = vsub.f32 %v1479, %v1480
        %v1482 = vmax.f32 %v1481, 0.0
        %v1483 = vsub.f32 %v1463, %v1475
        %v1484 = vadd.f32 %v1482, 1e-12
        %v1485 = vrsqrt.pop %v1484
        %v1486 = vmul.f32 %v1485, %v1484
        %v1487 = vmul.f32 %v1486, %v1485
        %v1488 = vmul.f32 0.5, %v1487
        %v1489 = vsub.f32 1.5, %v1488
        %v1490 = vmul.f32 %v1485, %v1489
        %vm1491 = vweird.f32 %v1484
        %vm1492 = vweird.f32 %v1485
        %vm1493 = vmor %vm1491, %vm1492
        %v1494 = vsel %vm1493, %v1485, %v1490
        %v1495 = vmul.f32 %v1483, %v1494
        %v1497 = vperm.slane %v1464, 0
        %v1499 = vmul.f32 %v1495, %v1497
        %v1501 = vperm.slane %v1465, 0
        %v1503 = vadd.f32 %v1499, %v1501
        %v1504 = vpack.c.bf16 %v1503, %v1503
        %v1505 = vld [vmem:[%s693] sm:$0xff]
        %v1506 = vld [vmem:[%s693 + $0x8] sm:$0xff]
        %v1507 = vld [vmem:[%s693 + $0x10] sm:$0xff]
        %v1508 = vld [vmem:[%s693 + $0x18] sm:$0xff]
        %v1509 = vld [vmem:[%s693 + $0x20] sm:$0xff]
        %v1510 = vld [vmem:[%s693 + $0x28] sm:$0xff]
        %v1511 = vld [vmem:[%s693 + $0x30] sm:$0xff]
        %v1512 = vld [vmem:[%s693 + $0x38] sm:$0xff]
        %v1513 = vld [vmem:[%s693 + $0x40] sm:$0xff]
        %v1514 = vld [vmem:[%s693 + $0x48] sm:$0xff]
        %v1515 = vld [vmem:[%s693 + $0x50] sm:$0xff]
        %v1516 = vld [vmem:[%s693 + $0x58] sm:$0xff]
        %v1517 = vld [vmem:[%s693 + $0x60] sm:$0xff]
        %v1518 = vld [vmem:[%s693 + $0x68] sm:$0xff]
        %v1519 = vld [vmem:[%s693 + $0x70] sm:$0xff]
        %v1520 = vld [vmem:[%s693 + $0x78] sm:$0xff]
        %v1521 = vld [vmem:[%s829] sm:$0x3]
        %v1523 = vperm.slane %v1521, 0
        %v1524 = vperm.slane %v1521, 1
        %v1543 = vunpack.c.l.b16 %v1505
        %v1544 = vunpack.c.h.b16 %v1505
        %v1545 = vunpack.c.l.b16 %v1506
        %v1546 = vunpack.c.h.b16 %v1506
        %v1547 = vunpack.c.l.b16 %v1507
        %v1548 = vunpack.c.h.b16 %v1507
        %v1549 = vunpack.c.l.b16 %v1508
        %v1550 = vunpack.c.h.b16 %v1508
        %v1551 = vunpack.c.l.b16 %v1509
        %v1552 = vunpack.c.h.b16 %v1509
        %v1553 = vunpack.c.l.b16 %v1510
        %v1554 = vunpack.c.h.b16 %v1510
        %v1555 = vunpack.c.l.b16 %v1511
        %v1556 = vunpack.c.h.b16 %v1511
        %v1557 = vunpack.c.l.b16 %v1512
        %v1558 = vunpack.c.h.b16 %v1512
        %v1559 = vunpack.c.l.b16 %v1513
        %v1560 = vunpack.c.h.b16 %v1513
        %v1561 = vunpack.c.l.b16 %v1514
        %v1562 = vunpack.c.h.b16 %v1514
        %v1563 = vunpack.c.l.b16 %v1515
        %v1564 = vunpack.c.h.b16 %v1515
        %v1565 = vunpack.c.l.b16 %v1516
        %v1566 = vunpack.c.h.b16 %v1516
        %v1567 = vunpack.c.l.b16 %v1517
        %v1568 = vunpack.c.h.b16 %v1517
        %v1569 = vunpack.c.l.b16 %v1518
        %v1570 = vunpack.c.h.b16 %v1518
        %v1571 = vunpack.c.l.b16 %v1519
        %v1572 = vunpack.c.h.b16 %v1519
        %v1573 = vunpack.c.l.b16 %v1520
        %v1574 = vunpack.c.h.b16 %v1520
        %v1575 = vpack.c.b16 %v1545, %v1543
        %v1576 = vpack.c.b16 %v1546, %v1544
        %v1577 = vpack.c.b16 %v1549, %v1547
        %v1578 = vpack.c.b16 %v1550, %v1548
        %v1579 = vpack.c.b16 %v1553, %v1551
        %v1580 = vpack.c.b16 %v1554, %v1552
        %v1581 = vpack.c.b16 %v1557, %v1555
        %v1582 = vpack.c.b16 %v1558, %v1556
        %v1583 = vpack.c.b16 %v1561, %v1559
        %v1584 = vpack.c.b16 %v1562, %v1560
        %v1585 = vpack.c.b16 %v1565, %v1563
        %v1586 = vpack.c.b16 %v1566, %v1564
        %v1587 = vpack.c.b16 %v1569, %v1567
        %v1588 = vpack.c.b16 %v1570, %v1568
        %v1589 = vpack.c.b16 %v1573, %v1571
        %v1590 = vpack.c.b16 %v1574, %v1572
        %1607 = vmatpush.bf16.msra.mxu0 %v1589
        %1608 = vmatpush.bf16.msra.mxu0 %v1587
        %1609 = vmatpush.bf16.msra.mxu0 %v1585
        %1610 = vmatpush.bf16.msra.mxu0 %v1583
        %1611 = vmatpush.bf16.msra.mxu0 %v1581
        %1612 = vmatpush.bf16.msra.mxu0 %v1579
        %1613 = vmatpush.bf16.msra.mxu0 %v1577
        %1614 = vmatpush.bf16.msra.mxu0 %v1575
        %1615 = vmatmul.bf16.gmra.mxu0 %v1504
        %v1616 = vpop.f32.mrf.mxu0
        %v1617 = vadd.f32 %v1523, %v1616
        %v1618 = vpop.f32.mrf.mxu0
        %1619 = vdwg.mxu0
        %1620 = vmatpush.bf16.msra.mxu0 %v1590
        %1621 = vmatpush.bf16.msra.mxu0 %v1588
        %1622 = vmatpush.bf16.msra.mxu0 %v1586
        %1623 = vmatpush.bf16.msra.mxu0 %v1584
        %1624 = vmatpush.bf16.msra.mxu0 %v1582
        %1625 = vmatpush.bf16.msra.mxu0 %v1580
        %1626 = vmatpush.bf16.msra.mxu0 %v1578
        %1627 = vmatpush.bf16.msra.mxu0 %v1576
        %1628 = vmatmul.bf16.gmra.mxu0 %v1504
        %v1629 = vpop.f32.mrf.mxu0
        %v1630 = vadd.f32 %v1524, %v1629
        %v1631 = vpop.f32.mrf.mxu0
        %1632 = vdwg.mxu0
        %v1633 = vmul.f32 %v1617, 0.5
        %v1634 = vmul.f32 %v1630, 0.5
        %v1635 = vmul.f32 %v1617, 0.044715
        %v1636 = vmul.f32 %v1630, 0.044715
        %v1637 = vmul.f32 %v1635, %v1617
        %v1638 = vmul.f32 %v1636, %v1630
        %v1639 = vmul.f32 %v1637, %v1617
        %v1640 = vmul.f32 %v1638, %v1630
        %v1641 = vadd.f32 %v1617, %v1639
        %v1642 = vadd.f32 %v1630, %v1640
        %v1643 = vmul.f32 %v1641, 0.7978846
        %v1644 = vmul.f32 %v1642, 0.7978846
        %v1645 = vtanh.pop %v1643
        %v1646 = vtanh.pop %v1644
        %v1647 = vadd.f32 %v1645, 1.0
        %v1648 = vadd.f32 %v1646, 1.0
        %v1649 = vmul.f32 %v1633, %v1647
        %v1650 = vmul.f32 %v1634, %v1648
        %v1651 = vpack.c.bf16 %v1649, %v1649
        %v1652 = vpack.c.bf16 %v1650, %v1650
        %v1653 = vld [vmem:[%s703] sm:$0xf]
        %v1654 = vld [vmem:[%s703 + $0x4] sm:$0xf]
        %v1655 = vld [vmem:[%s703 + $0x8] sm:$0xf]
        %v1656 = vld [vmem:[%s703 + $0xc] sm:$0xf]
        %v1657 = vld [vmem:[%s703 + $0x10] sm:$0xf]
        %v1658 = vld [vmem:[%s703 + $0x14] sm:$0xf]
        %v1659 = vld [vmem:[%s703 + $0x18] sm:$0xf]
        %v1660 = vld [vmem:[%s703 + $0x1c] sm:$0xf]
        %v1661 = vld [vmem:[%s703 + $0x20] sm:$0xf]
        %v1662 = vld [vmem:[%s703 + $0x24] sm:$0xf]
        %v1663 = vld [vmem:[%s703 + $0x28] sm:$0xf]
        %v1664 = vld [vmem:[%s703 + $0x2c] sm:$0xf]
        %v1665 = vld [vmem:[%s703 + $0x30] sm:$0xf]
        %v1666 = vld [vmem:[%s703 + $0x34] sm:$0xf]
        %v1667 = vld [vmem:[%s703 + $0x38] sm:$0xf]
        %v1668 = vld [vmem:[%s703 + $0x3c] sm:$0xf]
        %v1669 = vld [vmem:[%s703 + $0x40] sm:$0xf]
        %v1670 = vld [vmem:[%s703 + $0x44] sm:$0xf]
        %v1671 = vld [vmem:[%s703 + $0x48] sm:$0xf]
        %v1672 = vld [vmem:[%s703 + $0x4c] sm:$0xf]
        %v1673 = vld [vmem:[%s703 + $0x50] sm:$0xf]
        %v1674 = vld [vmem:[%s703 + $0x54] sm:$0xf]
        %v1675 = vld [vmem:[%s703 + $0x58] sm:$0xf]
        %v1676 = vld [vmem:[%s703 + $0x5c] sm:$0xf]
        %v1677 = vld [vmem:[%s703 + $0x60] sm:$0xf]
        %v1678 = vld [vmem:[%s703 + $0x64] sm:$0xf]
        %v1679 = vld [vmem:[%s703 + $0x68] sm:$0xf]
        %v1680 = vld [vmem:[%s703 + $0x6c] sm:$0xf]
        %v1681 = vld [vmem:[%s703 + $0x70] sm:$0xf]
        %v1682 = vld [vmem:[%s703 + $0x74] sm:$0xf]
        %v1683 = vld [vmem:[%s703 + $0x78] sm:$0xf]
        %v1684 = vld [vmem:[%s703 + $0x7c] sm:$0xf]
        %v1685 = vld [vmem:[%s832] sm:$0x1]
        %v1687 = vperm.slane %v1685, 0
        %v1721 = vunpack.c.l.b16 %v1653
        %v1722 = vunpack.c.l.b16 %v1654
        %v1723 = vunpack.c.l.b16 %v1655
        %v1724 = vunpack.c.l.b16 %v1656
        %v1725 = vunpack.c.l.b16 %v1657
        %v1726 = vunpack.c.l.b16 %v1658
        %v1727 = vunpack.c.l.b16 %v1659
        %v1728 = vunpack.c.l.b16 %v1660
        %v1729 = vunpack.c.l.b16 %v1661
        %v1730 = vunpack.c.l.b16 %v1662
        %v1731 = vunpack.c.l.b16 %v1663
        %v1732 = vunpack.c.l.b16 %v1664
        %v1733 = vunpack.c.l.b16 %v1665
        %v1734 = vunpack.c.l.b16 %v1666
        %v1735 = vunpack.c.l.b16 %v1667
        %v1736 = vunpack.c.l.b16 %v1668
        %v1737 = vunpack.c.l.b16 %v1669
        %v1738 = vunpack.c.l.b16 %v1670
        %v1739 = vunpack.c.l.b16 %v1671
        %v1740 = vunpack.c.l.b16 %v1672
        %v1741 = vunpack.c.l.b16 %v1673
        %v1742 = vunpack.c.l.b16 %v1674
        %v1743 = vunpack.c.l.b16 %v1675
        %v1744 = vunpack.c.l.b16 %v1676
        %v1745 = vunpack.c.l.b16 %v1677
        %v1746 = vunpack.c.l.b16 %v1678
        %v1747 = vunpack.c.l.b16 %v1679
        %v1748 = vunpack.c.l.b16 %v1680
        %v1749 = vunpack.c.l.b16 %v1681
        %v1750 = vunpack.c.l.b16 %v1682
        %v1751 = vunpack.c.l.b16 %v1683
        %v1752 = vunpack.c.l.b16 %v1684
        %v1753 = vpack.c.b16 %v1722, %v1721
        %v1754 = vpack.c.b16 %v1724, %v1723
        %v1755 = vpack.c.b16 %v1726, %v1725
        %v1756 = vpack.c.b16 %v1728, %v1727
        %v1757 = vpack.c.b16 %v1730, %v1729
        %v1758 = vpack.c.b16 %v1732, %v1731
        %v1759 = vpack.c.b16 %v1734, %v1733
        %v1760 = vpack.c.b16 %v1736, %v1735
        %v1761 = vpack.c.b16 %v1738, %v1737
        %v1762 = vpack.c.b16 %v1740, %v1739
        %v1763 = vpack.c.b16 %v1742, %v1741
        %v1764 = vpack.c.b16 %v1744, %v1743
        %v1765 = vpack.c.b16 %v1746, %v1745
        %v1766 = vpack.c.b16 %v1748, %v1747
        %v1767 = vpack.c.b16 %v1750, %v1749
        %v1768 = vpack.c.b16 %v1752, %v1751
        %1785 = vmatpush.bf16.msra.mxu0 %v1760
        %1786 = vmatpush.bf16.msra.mxu0 %v1759
        %1787 = vmatpush.bf16.msra.mxu0 %v1758
        %1788 = vmatpush.bf16.msra.mxu0 %v1757
        %1789 = vmatpush.bf16.msra.mxu0 %v1756
        %1790 = vmatpush.bf16.msra.mxu0 %v1755
        %1791 = vmatpush.bf16.msra.mxu0 %v1754
        %1792 = vmatpush.bf16.msra.mxu0 %v1753
        %1793 = vmatmul.bf16.gmra.mxu0 %v1651
        %v1794 = vpop.f32.mrf.mxu0
        %v1795 = vadd.f32 %v1687, %v1794
        %v1796 = vpop.f32.mrf.mxu0
        %1797 = vdwg.mxu0
        %1798 = vmatpush.bf16.msra.mxu0 %v1768
        %1799 = vmatpush.bf16.msra.mxu0 %v1767
        %1800 = vmatpush.bf16.msra.mxu0 %v1766
        %1801 = vmatpush.bf16.msra.mxu0 %v1765
        %1802 = vmatpush.bf16.msra.mxu0 %v1764
        %1803 = vmatpush.bf16.msra.mxu0 %v1763
        %1804 = vmatpush.bf16.msra.mxu0 %v1762
        %1805 = vmatpush.bf16.msra.mxu0 %v1761
        %1806 = vmatmul.bf16.gmra.mxu0 %v1652
        %v1807 = vpop.f32.mrf.mxu0
        %v1808 = vadd.f32 %v1795, %v1807
        %v1809 = vpop.f32.mrf.mxu0
        %1810 = vdwg.mxu0
        %v1811 = vadd.f32 %v1503, %v1808
        %v1812 = vld [vmem:[%s835] sm:$0x1]
        %v1813 = vld [vmem:[%s838] sm:$0x1]
        %1814 = vadd.xlane.f32.xlu0 %v1811
        %v1815 = vpop.xlane.xlu0 %1814
        %v1816 = vmul.f32 %v1815, %v1474
        %v1817 = vmul.f32 %v1811, %v1811
        %1818 = vadd.xlane.f32.xlu0 %v1817
        %v1819 = vpop.xlane.xlu0 %1818
        %v1820 = vmul.f32 %v1819, %v1474
        %v1821 = vmul.f32 %v1816, %v1816
        %v1822 = vsub.f32 %v1820, %v1821
        %v1823 = vmax.f32 %v1822, 0.0
        %v1824 = vsub.f32 %v1811, %v1816
        %v1825 = vadd.f32 %v1823, 1e-12
        %v1826 = vrsqrt.pop %v1825
        %v1827 = vmul.f32 %v1826, %v1825
        %v1828 = vmul.f32 %v1827, %v1826
        %v1829 = vmul.f32 0.5, %v1828
        %v1830 = vsub.f32 1.5, %v1829
        %v1831 = vmul.f32 %v1826, %v1830
        %vm1832 = vweird.f32 %v1825
        %vm1833 = vweird.f32 %v1826
        %vm1834 = vmor %vm1832, %vm1833
        %v1835 = vsel %vm1834, %v1826, %v1831
        %v1836 = vmul.f32 %v1824, %v1835
        %v1838 = vperm.slane %v1812, 0
        %v1840 = vmul.f32 %v1836, %v1838
        %v1842 = vperm.slane %v1813, 0
        %v1844 = vadd.f32 %v1840, %v1842
        %1845 = vst [vmem:[#allocation2] sm:$0xff] %v1844
        %p1846 = scmp.eq.s32.totalorder %s49, 1
        // Predicated region
        $region109: #{bert_encoder_forward.1} parent=87 // pred_check
          %p1847 = pneg %p1846
        $region110: #{bert_encoder_forward.1} parent=87 // pred_check_branch
          %1849 = sbr.rel (%p1847) target = $region112
        $region111: #{bert_encoder_forward.1} parent=87 // pred_region
          %v1850 = vld [vmem:[#allocation10] sm:$0xff]
          %v1851 = vld [vmem:[#allocation10 + $0x8] sm:$0xff]
          %v1852 = vld [vmem:[#allocation10 + $0x10] sm:$0xff]
          %v1853 = vld [vmem:[#allocation10 + $0x18] sm:$0xff]
          %v1854 = vld [vmem:[#allocation10 + $0x20] sm:$0xff]
          %v1855 = vld [vmem:[#allocation10 + $0x28] sm:$0xff]
          %v1856 = vld [vmem:[#allocation10 + $0x30] sm:$0xff]
          %v1857 = vld [vmem:[#allocation10 + $0x38] sm:$0xff]
          %v1858 = vld [vmem:[#allocation10 + $0x40] sm:$0xff]
          %v1859 = vld [vmem:[#allocation10 + $0x48] sm:$0xff]
          %v1860 = vld [vmem:[#allocation10 + $0x50] sm:$0xff]
          %v1861 = vld [vmem:[#allocation10 + $0x58] sm:$0xff]
          %v1862 = vld [vmem:[#allocation10 + $0x60] sm:$0xff]
          %v1863 = vld [vmem:[#allocation10 + $0x68] sm:$0xff]
          %v1864 = vld [vmem:[#allocation10 + $0x70] sm:$0xff]
          %v1865 = vld [vmem:[#allocation10 + $0x78] sm:$0xff]
          %v1866 = vld [vmem:[%s17] sm:$0x1]
          %v1868 = vperm.slane %v1866, 0
          %1870 = vmatpush.msra.mxu0 %v1865
          %1871 = vmatpush.msra.mxu0 %v1864
          %1872 = vmatpush.msra.mxu0 %v1863
          %1873 = vmatpush.msra.mxu0 %v1862
          %1874 = vmatpush.msra.mxu0 %v1861
          %1875 = vmatpush.msra.mxu0 %v1860
          %1876 = vmatpush.msra.mxu0 %v1859
          %1877 = vmatpush.msra.mxu0 %v1858
          %1878 = vmatpush.msra.mxu0 %v1857
          %1879 = vmatpush.msra.mxu0 %v1856
          %1880 = vmatpush.msra.mxu0 %v1855
          %1881 = vmatpush.msra.mxu0 %v1854
          %1882 = vmatpush.msra.mxu0 %v1853
          %1883 = vmatpush.msra.mxu0 %v1852
          %1884 = vmatpush.msra.mxu0 %v1851
          %1885 = vmatpush.msra.mxu0 %v1850
          %1886 = vmatmul.f32.gmra.mxu0 %v1844
          %v1887 = vpop.f32.mrf.mxu0
          %v1888 = vadd.f32 %v1868, %v1887
          %1889 = vdwg.mxu0
          %1890 = vst [vmem:[%s842] sm:$0xff] %v1888
        $region112: #{bert_encoder_forward.1} parent=87 // pred_fallthru
          _
        %p1891 = scmp.lt.s32.totalorder %s48, 1
        %s1892 = scalar_select %p1891, %s48, 1
        %s1893 = smul.addr %s1892, 8
        %s1894 = scalar_lea.vmem %s18, %s1893
        // Predicated region
        $region113: #{bert_encoder_forward.1} parent=87 // pred_check
          %p1895 = pneg %p496
        $region114: #{bert_encoder_forward.1} parent=87 // pred_check_branch
          %1897 = sbr.rel (%p1895) target = $region116
        $region115: #{bert_encoder_forward.1} parent=87 // pred_region
          _
        $region116: #{bert_encoder_forward.1} parent=87 // pred_fallthru
          _
      $region88: #{bert_encoder_forward.1} parent=5 // pred_fallthru
        _
      %p1898 = scmp.le.s32.totalorder 2, %s39
      // Predicated region
      $region117: #{bert_encoder_forward.1} parent=5 // pred_check
        %p1899 = pneg %p1898
      $region118: #{bert_encoder_forward.1} parent=5 // pred_check_branch
        %1901 = sbr.rel (%p1899) target = $region120
      $region119: #{bert_encoder_forward.1} parent=5 // pred_region
        %s1902 = ssub.s32 %s39, 2
        // Predicated region
        $region121: #{bert_encoder_forward.1} parent=119 // pred_check
          %p1903 = pneg %p502
        $region122: #{bert_encoder_forward.1} parent=119 // pred_check_branch
          %1905 = sbr.rel (%p1903) target = $region124
        $region123: #{bert_encoder_forward.1} parent=119 // pred_region
          %p1906 = scmp.lt.s32.totalorder %s50, 1
          %s1907 = scalar_select %p1906, %s50, 1
          %s1908 = smul.addr %s1907, 8
          %s1909 = scalar_lea.vmem %s18, %s1908
        $region124: #{bert_encoder_forward.1} parent=119 // pred_fallthru
          _
      $region120: #{bert_encoder_forward.1} parent=5 // pred_fallthru
        _
    $region6: #{bert_encoder_forward.1} parent=1 // loop_footer
      %s43 = sadd.s32 1, %s39
    $region7: #{bert_encoder_forward.1} parent=1 // loop_footer_branch
      %38 = sbr.rel target = $region3
    $region8: #{bert_encoder_forward.1} parent=1 // loop_exit
      _
    %1910 = vsyncpa [#allocation6], 1
    %s1911 = scalar_lea.sflag [#allocation6], 1
    %1912 = vsyncpa %s1911, 1
    %1913 = vsyncpa [#allocation8], 1
    %s1914 = scalar_lea.sflag [#allocation8], 1
    %1915 = vsyncpa %s1914, 1
    %1916 = vsyncpa [#allocation11], 1

</llo_original>
